<compile_context>
chip_gen: v7x
topology: tpu7x:2x2x1
jax: 0.10.0
libtpu: 0.0.40
codegen_flags: <defaults>
</compile_context>

<pallas_src>
import functools

import jax
import jax.numpy as jnp
from jax.experimental import pallas as pl
from jax.experimental.pallas import tpu as pltpu

# --- globals mirrored from GNN_edge_regression.py ---------------------------
GNN_edge_num_layers = 3            # -> 2 GINConv layers
GNN_edge_decoder_type = "linear"   # score = W(cat([h_u, h_v], 1))
num_col = 12                       # -> decoder output dim = int(num_col * 2 / 3) = 8
BN_EPS = 1e-5

LANE = 128                         # TPU lane width; hidden / decoder dims padded to this
SUB_F32 = 8                        # f32 sublane granularity
SUB_BF16 = 16                      # bf16 rows per packed sublane group


def _round_up(x, m):
    return ((x + m - 1) // m) * m


def _bn_relu(x, gamma, beta, inv_n):
    """nn.BatchNorm1d (training mode, biased variance) + ReLU.

    One-pass statistics (E[x^2] - mean^2) so the (N,H) tile is read once, and
    the normalize/affine is fused into a single multiply-add.  inv_n is
    1/num_real_rows; zero-padded rows contribute nothing to either sum.
    """
    s = jnp.sum(x, axis=0, keepdims=True)
    ss = jnp.sum(x * x, axis=0, keepdims=True)
    mean = s * inv_n
    var = jnp.maximum(ss * inv_n - mean * mean, 0.0)
    scale = jax.lax.rsqrt(var + BN_EPS) * gamma
    shift = beta - mean * scale
    return jnp.maximum(x * scale + shift, 0.0)


def _gin_stack(h0_bf16, adj_bf16, w_at, vec_at, *, num_layers, inv_n, row_mask):
    """Shared GIN-layer math (pure jnp) used by both the Pallas kernel and the
    mirrored JAX reference.  `adj` already has (1+eps) folded into its diagonal,
    so the GINConv update (1+eps)*h + sum_neighbours(h) is one MXU matmul.
    w_at(i) -> (LANE,LANE) bf16 weight, vec_at(i) -> (1,LANE) f32 row."""
    L = num_layers
    h_bf = h0_bf16                          # bf16 MXU operand
    h_sum = h0_bf16.astype(jnp.float32)     # f32 accumulation of hidden_rep
    for l in range(L):
        # GINConv aggregation (bidirectional edges + self loop + (1+eps)*h)
        rst = jnp.dot(adj_bf16, h_bf, preferred_element_type=jnp.float32)
        # MLP: Linear(H,H,nobias) -> BN -> ReLU -> Linear(H,H,nobias)
        z = jnp.dot(rst.astype(jnp.bfloat16), w_at(l),
                    preferred_element_type=jnp.float32)
        z = _bn_relu(z, vec_at(l), vec_at(L + l), inv_n)
        z = jnp.dot(z.astype(jnp.bfloat16), w_at(L + l),
                    preferred_element_type=jnp.float32)
        if row_mask is not None:
            z = z * row_mask        # keep zero-padded node rows out of batch stats
        # outer BatchNorm1d + ReLU
        h = _bn_relu(z, vec_at(2 * L + l), vec_at(3 * L + l), inv_n)
        h_sum = h_sum + h
        h_bf = h.astype(jnp.bfloat16)
    return h_sum


def gin_kernel(eidx_ref, h0_ref, adj_ref, wpack_ref, wdec_ref, vecs_ref,
               score_ref, hsum_ref, gat_ref, *,
               num_layers, n_real, n_pad, e_pad):
    L = num_layers
    b = pl.program_id(0)
    inv_n = 1.0 / float(n_real)

    def w_at(i):
        return wpack_ref[i]                     # (LANE, LANE) bf16

    def vec_at(i):
        return vecs_ref[pl.ds(i, 1), :]         # (1, LANE) f32

    row_mask = None
    if n_pad > n_real:
        # materialized once, full lane-dense (NP,LANE) mask, reused every layer
        row_mask = (jax.lax.broadcasted_iota(jnp.int32, (n_pad, LANE), 0)
                    < n_real).astype(jnp.float32)

    h_sum = _gin_stack(h0_ref[...], adj_ref[...], w_at, vec_at,
                       num_layers=L, inv_n=inv_n, row_mask=row_mask)
    hsum_ref[...] = h_sum

    # ---- edge decoder ('linear'): W(cat([h[u], h[v]], 1)) -------------------
    # Row gather via dynamic sublane slices (SMEM-driven), packing 8 gathered
    # [h_u | h_v] rows into one (8, 2*LANE) tile so every store is a full
    # unmasked vst (instead of 2*EP masked (1,128) stores).
    off = b * (2 * e_pad)
    # TODO(synk): switch to lax.fori_loop(..., unroll=8) over edge groups once
    # e_pad grows beyond a few dozen (bounds code size / vreg live ranges).
    for base in range(0, e_pad, SUB_F32):
        rows = []
        for e in range(base, base + SUB_F32):
            u = eidx_ref[off + e]
            v = eidx_ref[off + e_pad + e]
            hu = hsum_ref[pl.ds(u, 1), :]                    # (1, LANE)
            hv = hsum_ref[pl.ds(v, 1), :]                    # (1, LANE)
            rows.append(jnp.concatenate([hu, hv], axis=1))   # (1, 2*LANE)
        gat_ref[pl.ds(base, SUB_F32), :] = jnp.concatenate(rows, axis=0)

    # single K=2*LANE matmul against the pre-concatenated decoder weight slab
    h_cat = gat_ref[...].astype(jnp.bfloat16)                # (EP, 2*LANE)
    score_ref[...] = (jnp.dot(h_cat, wdec_ref[...],
                              preferred_element_type=jnp.float32)
                      + vec_at(4 * L))                       # lane-dense (EP,128) store


def gin_forward(edge_idx_flat, h0p, adjp, wpack, wdec, vecs, *,
                num_layers, n_real, e_real, out_dim):
    B, n_pad, hp = h0p.shape
    assert hp == LANE
    L = num_layers
    e_pad = edge_idx_flat.shape[0] // (2 * B)
    assert e_pad % SUB_F32 == 0

    kernel = functools.partial(gin_kernel, num_layers=L, n_real=n_real,
                               n_pad=n_pad, e_pad=e_pad)

    grid_spec = pltpu.PrefetchScalarGridSpec(
        num_scalar_prefetch=1,          # flat edge endpoints -> SMEM
        grid=(B,),                      # one grid step per graph
        in_specs=[
            # per-graph blocks
            pl.BlockSpec((None, n_pad, LANE), lambda b, eidx: (b, 0, 0)),   # h0 (bf16)
            pl.BlockSpec((None, n_pad, n_pad), lambda b, eidx: (b, 0, 0)),  # adj+(1+eps)I (bf16)
            # shared parameter blocks (constant index_map -> fetched once)
            pl.BlockSpec((2 * L, LANE, LANE), lambda b, eidx: (0, 0, 0)),   # layer weights (bf16)
            pl.BlockSpec((2 * LANE, LANE), lambda b, eidx: (0, 0)),         # decoder weight slab (bf16)
            pl.BlockSpec((4 * L + 1, LANE), lambda b, eidx: (0, 0)),        # BN params + dec. bias (f32)
        ],
        out_specs=pl.BlockSpec((None, e_pad, LANE), lambda b, eidx: (b, 0, 0)),
        scratch_shapes=[
            pltpu.VMEM((n_pad, LANE), jnp.float32),         # h_sum (for the row gather)
            pltpu.VMEM((e_pad, 2 * LANE), jnp.float32),     # gathered [h_u | h_v] rows
        ],
    )
    score_pad = pl.pallas_call(
        kernel,
        out_shape=jax.ShapeDtypeStruct((B, e_pad, LANE), jnp.float32),
        grid_spec=grid_spec,
        compiler_params=pltpu.CompilerParams(
            dimension_semantics=("parallel",)),   # batch axis split across cores
    )(edge_idx_flat, h0p, adjp, wpack, wdec, vecs)
    return score_pad[:, :e_real, :out_dim]


# --- references --------------------------------------------------------------
def gin_reference_mirrored(edge_idx_flat, h0p, adjp, wpack, wdec, vecs, *,
                           num_layers, n_real, e_real, e_pad, out_dim):
    """Plain-JAX reference with the SAME numerics as the kernel (bf16 on the
    MXU, f32 accumulation, one-pass BN) -> tight tolerance."""
    L = num_layers
    B, n_pad, _ = h0p.shape
    inv_n = 1.0 / float(n_real)
    row_mask = None
    if n_pad > n_real:
        row_mask = (jnp.arange(n_pad)[:, None] < n_real).astype(jnp.float32)
    outs = []
    for bb in range(B):
        h_sum = _gin_stack(h0p[bb], adjp[bb], lambda i: wpack[i],
                           lambda i: vecs[i:i + 1],
                           num_layers=L, inv_n=inv_n, row_mask=row_mask)
        base = bb * 2 * e_pad
        u = edge_idx_flat[base:base + e_pad]
        v = edge_idx_flat[base + e_pad:base + 2 * e_pad]
        h_cat = jnp.concatenate([h_sum[u], h_sum[v]], axis=1).astype(jnp.bfloat16)
        score = (jnp.dot(h_cat, wdec, preferred_element_type=jnp.float32)
                 + vecs[4 * L:4 * L + 1])
        outs.append(score[:e_real, :out_dim])
    return jnp.stack(outs)


def gin_reference_f32(h0, adj_sl, w1, w2, bnm_g, bnm_b, bno_g, bno_b,
                      u_idx, v_idx, w_dec, b_dec, *, eps):
    """Full-f32, unpadded, single-graph reference with the original module's
    semantics."""
    def bn(x, g, b):
        mean = jnp.mean(x, axis=0, keepdims=True)
        var = jnp.mean((x - mean) ** 2, axis=0, keepdims=True)
        return (x - mean) * jax.lax.rsqrt(var + BN_EPS) * g + b

    h = h0
    h_sum = h
    for l in range(w1.shape[0]):
        rst = (1.0 + eps) * h + adj_sl @ h
        z = jnp.maximum(bn(rst @ w1[l], bnm_g[l], bnm_b[l]), 0.0)
        z = z @ w2[l]
        h = jnp.maximum(bn(z, bno_g[l], bno_b[l]), 0.0)
        h_sum = h_sum + h
    h_cat = jnp.concatenate([h_sum[u_idx], h_sum[v_idx]], axis=1)
    return h_cat @ w_dec + b_dec


if __name__ == "__main__":
    key = jax.random.PRNGKey(0)

    numberofglycos = 10
    hidden_dim = 32
    init_eps = 0.1
    B = 4                                     # graphs per batch (grid dim)
    N = 16                                    # nodes per graph
    E = 8                                     # original (directed) edges per graph
    L = GNN_edge_num_layers - 1               # 2 GIN layers
    out_dim = int(num_col * 2 / 3)            # 8

    keys = jax.random.split(key, 8)
    node_ids = jax.random.randint(keys[0], (B, N), 0, numberofglycos)

    # graph: deterministic chain of E directed edges (same structure per graph)
    u_idx = jnp.arange(E, dtype=jnp.int32)
    v_idx = jnp.arange(1, E + 1, dtype=jnp.int32)

    # parameters (deterministic synthetic init)
    emb_table = 0.1 * jax.random.normal(keys[1], (numberofglycos, hidden_dim), jnp.float32)
    w1 = 0.1 * jax.random.normal(keys[2], (L, hidden_dim, hidden_dim), jnp.float32)
    w2 = 0.1 * jax.random.normal(keys[3], (L, hidden_dim, hidden_dim), jnp.float32)
    bnm_g = jnp.ones((L, hidden_dim), jnp.float32)    # MLP-internal BN gamma/beta
    bnm_b = jnp.zeros((L, hidden_dim), jnp.float32)
    bno_g = jnp.ones((L, hidden_dim), jnp.float32)    # per-layer outer BN gamma/beta
    bno_b = jnp.zeros((L, hidden_dim), jnp.float32)
    w_dec = 0.1 * jax.random.normal(keys[4], (2 * hidden_dim, out_dim), jnp.float32)
    b_dec = 0.1 * jax.random.normal(keys[5], (1, out_dim), jnp.float32)
    # TODO(synk): W1/W2/W3/predictH/SumPooling are unused for decoder_type='linear'
    # and this forward pass; not instantiated here.

    # --- wrapper glue: embedding gather, dense adjacency, packing, padding ---
    H = hidden_dim
    NP = _round_up(N, SUB_BF16)               # bf16 operands -> 16-row padding
    EP = _round_up(E, SUB_F32)

    h0 = emb_table[node_ids]                                    # (B, N, H) f32
    h0p = (jnp.zeros((B, NP, LANE), jnp.float32).at[:, :N, :H].set(h0)
           .astype(jnp.bfloat16))                               # bf16 MXU operand

    adj = jnp.zeros((N, N), jnp.float32)
    adj = adj.at[v_idx, u_idx].add(1.0)                         # original u->v
    adj = adj.at[u_idx, v_idx].add(1.0)                         # added reverse v->u
    adj = adj.at[jnp.arange(N), jnp.arange(N)].add(1.0)         # add_self_loop
    adj_fold = adj + (1.0 + init_eps) * jnp.eye(N, dtype=jnp.float32)  # fold (1+eps)*h
    adjp_single = (jnp.zeros((NP, NP), jnp.float32).at[:N, :N].set(adj_fold)
                   .astype(jnp.bfloat16))
    adjp = jnp.tile(adjp_single[None], (B, 1, 1))               # (B, NP, NP) bf16

    # pack the layer matmul weights into one bf16 buffer: [w1_0..w1_{L-1}, w2_0..w2_{L-1}]
    wpack = jnp.zeros((2 * L, LANE, LANE), jnp.float32)
    for l in range(L):
        wpack = wpack.at[l, :H, :H].set(w1[l])
        wpack = wpack.at[L + l, :H, :H].set(w2[l])
    wpack = wpack.astype(jnp.bfloat16)

    # pre-concatenated decoder weight slab: rows [0:H) act on h_u, [LANE:LANE+H) on h_v
    wdec = jnp.zeros((2 * LANE, LANE), jnp.float32)
    wdec = wdec.at[:H, :out_dim].set(w_dec[:H])
    wdec = wdec.at[LANE:LANE + H, :out_dim].set(w_dec[H:])
    wdec = wdec.astype(jnp.bfloat16)

    # pack all per-feature vectors (BN gamma/beta + decoder bias) into one f32 buffer
    vecs = jnp.zeros((4 * L + 1, LANE), jnp.float32)
    for l in range(L):
        vecs = vecs.at[l, :H].set(bnm_g[l])
        vecs = vecs.at[L + l, :H].set(bnm_b[l])
        vecs = vecs.at[2 * L + l, :H].set(bno_g[l])
        vecs = vecs.at[3 * L + l, :H].set(bno_b[l])
    vecs = vecs.at[4 * L, :out_dim].set(b_dec[0])

    # edge endpoints for the decoder gather (flat SMEM int32, per graph:
    # [u_0..u_{EP-1}, v_0..v_{EP-1}])
    edge_idx_g = jnp.zeros((2 * EP,), jnp.int32)
    edge_idx_g = edge_idx_g.at[:E].set(u_idx).at[EP:EP + E].set(v_idx)
    edge_idx_flat = jnp.tile(edge_idx_g, (B,))                  # (B * 2 * EP,)

    score = gin_forward(edge_idx_flat, h0p, adjp, wpack, wdec, vecs,
                        num_layers=L, n_real=N, e_real=E, out_dim=out_dim)
    score = jax.block_until_ready(score)
    assert score.shape == (B, E, out_dim), score.shape

    # tight check vs a reference with identical bf16-MXU / f32-accumulate numerics
    ref_bf16 = gin_reference_mirrored(edge_idx_flat, h0p, adjp, wpack, wdec, vecs,
                                      num_layers=L, n_real=N, e_real=E,
                                      e_pad=EP, out_dim=out_dim)
    assert jnp.allclose(score, ref_bf16, atol=2e-3, rtol=2e-3), (
        float(jnp.max(jnp.abs(score - ref_bf16))))

    # loose check vs the full-f32 original-module semantics (bounds bf16 drift only)
    ref_f32 = jnp.stack([
        gin_reference_f32(h0[bb], adj, w1, w2, bnm_g, bnm_b, bno_g, bno_b,
                          u_idx, v_idx, w_dec, b_dec, eps=init_eps)
        for bb in range(B)])
    assert jnp.allclose(score, ref_f32, atol=2e-1, rtol=2e-1), (
        float(jnp.max(jnp.abs(score - ref_f32))))

    print("KERNEL_OK")
</pallas_src>

<mosaic_0001>
module attributes {stable_mosaic.version = 11 : i64} {
  func.func @gin_kernel(%arg0: i32, %arg1: memref<64xi32, #tpu.memory_space<smem>>, %arg2: memref<1x16x128xbf16, #tpu.memory_space<vmem>>, %arg3: memref<1x16x16xbf16, #tpu.memory_space<vmem>>, %arg4: memref<4x128x128xbf16, #tpu.memory_space<vmem>>, %arg5: memref<256x128xbf16, #tpu.memory_space<vmem>>, %arg6: memref<9x128xf32, #tpu.memory_space<vmem>>, %arg7: memref<1x8x128xf32, #tpu.memory_space<vmem>>, %arg8: memref<16x128xf32, #tpu.memory_space<vmem>>, %arg9: memref<8x256xf32, #tpu.memory_space<vmem>>) attributes {dimension_semantics = [#tpu.dimension_semantics<parallel>], iteration_bounds = array<i64: 4>, scalar_prefetch = 1 : i64, scratch_operands = 2 : i64, tpu.core_type = #tpu.core_type<tc>, window_params = [{transform_indices = @transform_0, window_bounds = array<i64: 1, 16, 128>}, {transform_indices = @transform_1, window_bounds = array<i64: 1, 16, 16>}, {pipeline_mode = #tpu.pipeline_mode<synchronous>, transform_indices = @transform_2, window_bounds = array<i64: 4, 128, 128>}, {pipeline_mode = #tpu.pipeline_mode<synchronous>, transform_indices = @transform_3, window_bounds = array<i64: 256, 128>}, {pipeline_mode = #tpu.pipeline_mode<synchronous>, transform_indices = @transform_4, window_bounds = array<i64: 9, 128>}, {transform_indices = @transform_5, window_bounds = array<i64: 1, 8, 128>}]} {
    %c0 = arith.constant 0 : index
    %c0_0 = arith.constant 0 : index
    %c0_1 = arith.constant 0 : index
    %0 = vector.load %arg2[%c0, %c0_0, %c0_1] : memref<1x16x128xbf16, #tpu.memory_space<vmem>>, vector<1x16x128xbf16>
    %1 = vector.shape_cast %0 : vector<1x16x128xbf16> to vector<16x128xbf16>
    %c0_2 = arith.constant 0 : index
    %c0_3 = arith.constant 0 : index
    %c0_4 = arith.constant 0 : index
    %2 = vector.load %arg3[%c0_2, %c0_3, %c0_4] : memref<1x16x16xbf16, #tpu.memory_space<vmem>>, vector<1x16x16xbf16>
    %3 = vector.shape_cast %2 : vector<1x16x16xbf16> to vector<16x16xbf16>
    %4 = arith.extf %1 : vector<16x128xbf16> to vector<16x128xf32>
    %cst = arith.constant dense<0.000000e+00> : vector<16x128xf32>
    %5 = tpu.matmul %3, %1, %cst {dimension_numbers = #tpu.dot_dimension_numbers<[1], [0], [0], [1], [0, 0, 1, 1], [], []>} : vector<16x16xbf16>, vector<16x128xbf16>, vector<16x128xf32> -> vector<16x128xf32>
    %6 = arith.truncf %5 : vector<16x128xf32> to vector<16x128xbf16>
    %c0_5 = arith.constant 0 : index
    %c0_6 = arith.constant 0 : index
    %c0_7 = arith.constant 0 : index
    %7 = vector.load %arg4[%c0_5, %c0_6, %c0_7] : memref<4x128x128xbf16, #tpu.memory_space<vmem>>, vector<1x128x128xbf16>
    %8 = vector.shape_cast %7 : vector<1x128x128xbf16> to vector<128x128xbf16>
    %cst_8 = arith.constant dense<0.000000e+00> : vector<16x128xf32>
    %9 = tpu.matmul %6, %8, %cst_8 {dimension_numbers = #tpu.dot_dimension_numbers<[1], [0], [0], [1], [0, 0, 1, 1], [], []>} : vector<16x128xbf16>, vector<128x128xbf16>, vector<16x128xf32> -> vector<16x128xf32>
    %c0_9 = arith.constant 0 : index
    %c0_10 = arith.constant 0 : index
    %10 = vector.load %arg6[%c0_9, %c0_10] : memref<9x128xf32, #tpu.memory_space<vmem>>, vector<1x128xf32>
    %c2 = arith.constant 2 : index
    %c0_11 = arith.constant 0 : index
    %11 = vector.load %arg6[%c2, %c0_11] : memref<9x128xf32, #tpu.memory_space<vmem>>, vector<1x128xf32>
    %cst_12 = arith.constant dense<0.000000e+00> : vector<128xf32>
    %12 = vector.multi_reduction <add>, %9, %cst_12 [0] : vector<16x128xf32> to vector<128xf32>
    %13 = vector.shape_cast %12 : vector<128xf32> to vector<1x128xf32>
    %14 = arith.mulf %9, %9 : vector<16x128xf32>
    %cst_13 = arith.constant dense<0.000000e+00> : vector<128xf32>
    %15 = vector.multi_reduction <add>, %14, %cst_13 [0] : vector<16x128xf32> to vector<128xf32>
    %16 = vector.shape_cast %15 : vector<128xf32> to vector<1x128xf32>
    %cst_14 = arith.constant 6.250000e-02 : f32
    %17 = vector.broadcast %cst_14 : f32 to vector<1x128xf32>
    %18 = arith.mulf %13, %17 : vector<1x128xf32>
    %cst_15 = arith.constant 6.250000e-02 : f32
    %19 = vector.broadcast %cst_15 : f32 to vector<1x128xf32>
    %20 = arith.mulf %16, %19 : vector<1x128xf32>
    %21 = arith.mulf %18, %18 : vector<1x128xf32>
    %22 = arith.subf %20, %21 : vector<1x128xf32>
    %cst_16 = arith.constant 0.000000e+00 : f32
    %23 = vector.broadcast %cst_16 : f32 to vector<1x128xf32>
    %24 = arith.maximumf %22, %23 : vector<1x128xf32>
    %cst_17 = arith.constant 9.99999974E-6 : f32
    %25 = vector.broadcast %cst_17 : f32 to vector<1x128xf32>
    %26 = arith.addf %24, %25 : vector<1x128xf32>
    %27 = math.rsqrt %26 : vector<1x128xf32>
    %28 = arith.mulf %27, %10 : vector<1x128xf32>
    %29 = arith.mulf %18, %28 : vector<1x128xf32>
    %30 = arith.subf %11, %29 : vector<1x128xf32>
    %31 = vector.broadcast %28 : vector<1x128xf32> to vector<16x128xf32>
    %32 = arith.mulf %9, %31 : vector<16x128xf32>
    %33 = vector.broadcast %30 : vector<1x128xf32> to vector<16x128xf32>
    %34 = arith.addf %32, %33 : vector<16x128xf32>
    %cst_18 = arith.constant 0.000000e+00 : f32
    %35 = vector.broadcast %cst_18 : f32 to vector<16x128xf32>
    %36 = arith.maximumf %34, %35 : vector<16x128xf32>
    %37 = arith.truncf %36 : vector<16x128xf32> to vector<16x128xbf16>
    %c2_19 = arith.constant 2 : index
    %c0_20 = arith.constant 0 : index
    %c0_21 = arith.constant 0 : index
    %38 = vector.load %arg4[%c2_19, %c0_20, %c0_21] : memref<4x128x128xbf16, #tpu.memory_space<vmem>>, vector<1x128x128xbf16>
    %39 = vector.shape_cast %38 : vector<1x128x128xbf16> to vector<128x128xbf16>
    %cst_22 = arith.constant dense<0.000000e+00> : vector<16x128xf32>
    %40 = tpu.matmul %37, %39, %cst_22 {dimension_numbers = #tpu.dot_dimension_numbers<[1], [0], [0], [1], [0, 0, 1, 1], [], []>} : vector<16x128xbf16>, vector<128x128xbf16>, vector<16x128xf32> -> vector<16x128xf32>
    %c4 = arith.constant 4 : index
    %c0_23 = arith.constant 0 : index
    %41 = vector.load %arg6[%c4, %c0_23] : memref<9x128xf32, #tpu.memory_space<vmem>>, vector<1x128xf32>
    %c6 = arith.constant 6 : index
    %c0_24 = arith.constant 0 : index
    %42 = vector.load %arg6[%c6, %c0_24] : memref<9x128xf32, #tpu.memory_space<vmem>>, vector<1x128xf32>
    %cst_25 = arith.constant dense<0.000000e+00> : vector<128xf32>
    %43 = vector.multi_reduction <add>, %40, %cst_25 [0] : vector<16x128xf32> to vector<128xf32>
    %44 = vector.shape_cast %43 : vector<128xf32> to vector<1x128xf32>
    %45 = arith.mulf %40, %40 : vector<16x128xf32>
    %cst_26 = arith.constant dense<0.000000e+00> : vector<128xf32>
    %46 = vector.multi_reduction <add>, %45, %cst_26 [0] : vector<16x128xf32> to vector<128xf32>
    %47 = vector.shape_cast %46 : vector<128xf32> to vector<1x128xf32>
    %cst_27 = arith.constant 6.250000e-02 : f32
    %48 = vector.broadcast %cst_27 : f32 to vector<1x128xf32>
    %49 = arith.mulf %44, %48 : vector<1x128xf32>
    %cst_28 = arith.constant 6.250000e-02 : f32
    %50 = vector.broadcast %cst_28 : f32 to vector<1x128xf32>
    %51 = arith.mulf %47, %50 : vector<1x128xf32>
    %52 = arith.mulf %49, %49 : vector<1x128xf32>
    %53 = arith.subf %51, %52 : vector<1x128xf32>
    %cst_29 = arith.constant 0.000000e+00 : f32
    %54 = vector.broadcast %cst_29 : f32 to vector<1x128xf32>
    %55 = arith.maximumf %53, %54 : vector<1x128xf32>
    %cst_30 = arith.constant 9.99999974E-6 : f32
    %56 = vector.broadcast %cst_30 : f32 to vector<1x128xf32>
    %57 = arith.addf %55, %56 : vector<1x128xf32>
    %58 = math.rsqrt %57 : vector<1x128xf32>
    %59 = arith.mulf %58, %41 : vector<1x128xf32>
    %60 = arith.mulf %49, %59 : vector<1x128xf32>
    %61 = arith.subf %42, %60 : vector<1x128xf32>
    %62 = vector.broadcast %59 : vector<1x128xf32> to vector<16x128xf32>
    %63 = arith.mulf %40, %62 : vector<16x128xf32>
    %64 = vector.broadcast %61 : vector<1x128xf32> to vector<16x128xf32>
    %65 = arith.addf %63, %64 : vector<16x128xf32>
    %cst_31 = arith.constant 0.000000e+00 : f32
    %66 = vector.broadcast %cst_31 : f32 to vector<16x128xf32>
    %67 = arith.maximumf %65, %66 : vector<16x128xf32>
    %68 = arith.addf %4, %67 : vector<16x128xf32>
    %69 = arith.truncf %67 : vector<16x128xf32> to vector<16x128xbf16>
    %cst_32 = arith.constant dense<0.000000e+00> : vector<16x128xf32>
    %70 = tpu.matmul %3, %69, %cst_32 {dimension_numbers = #tpu.dot_dimension_numbers<[1], [0], [0], [1], [0, 0, 1, 1], [], []>} : vector<16x16xbf16>, vector<16x128xbf16>, vector<16x128xf32> -> vector<16x128xf32>
    %71 = arith.truncf %70 : vector<16x128xf32> to vector<16x128xbf16>
    %c1 = arith.constant 1 : index
    %c0_33 = arith.constant 0 : index
    %c0_34 = arith.constant 0 : index
    %72 = vector.load %arg4[%c1, %c0_33, %c0_34] : memref<4x128x128xbf16, #tpu.memory_space<vmem>>, vector<1x128x128xbf16>
    %73 = vector.shape_cast %72 : vector<1x128x128xbf16> to vector<128x128xbf16>
    %cst_35 = arith.constant dense<0.000000e+00> : vector<16x128xf32>
    %74 = tpu.matmul %71, %73, %cst_35 {dimension_numbers = #tpu.dot_dimension_numbers<[1], [0], [0], [1], [0, 0, 1, 1], [], []>} : vector<16x128xbf16>, vector<128x128xbf16>, vector<16x128xf32> -> vector<16x128xf32>
    %c1_36 = arith.constant 1 : index
    %c0_37 = arith.constant 0 : index
    %75 = vector.load %arg6[%c1_36, %c0_37] : memref<9x128xf32, #tpu.memory_space<vmem>>, vector<1x128xf32>
    %c3 = arith.constant 3 : index
    %c0_38 = arith.constant 0 : index
    %76 = vector.load %arg6[%c3, %c0_38] : memref<9x128xf32, #tpu.memory_space<vmem>>, vector<1x128xf32>
    %cst_39 = arith.constant dense<0.000000e+00> : vector<128xf32>
    %77 = vector.multi_reduction <add>, %74, %cst_39 [0] : vector<16x128xf32> to vector<128xf32>
    %78 = vector.shape_cast %77 : vector<128xf32> to vector<1x128xf32>
    %79 = arith.mulf %74, %74 : vector<16x128xf32>
    %cst_40 = arith.constant dense<0.000000e+00> : vector<128xf32>
    %80 = vector.multi_reduction <add>, %79, %cst_40 [0] : vector<16x128xf32> to vector<128xf32>
    %81 = vector.shape_cast %80 : vector<128xf32> to vector<1x128xf32>
    %cst_41 = arith.constant 6.250000e-02 : f32
    %82 = vector.broadcast %cst_41 : f32 to vector<1x128xf32>
    %83 = arith.mulf %78, %82 : vector<1x128xf32>
    %cst_42 = arith.constant 6.250000e-02 : f32
    %84 = vector.broadcast %cst_42 : f32 to vector<1x128xf32>
    %85 = arith.mulf %81, %84 : vector<1x128xf32>
    %86 = arith.mulf %83, %83 : vector<1x128xf32>
    %87 = arith.subf %85, %86 : vector<1x128xf32>
    %cst_43 = arith.constant 0.000000e+00 : f32
    %88 = vector.broadcast %cst_43 : f32 to vector<1x128xf32>
    %89 = arith.maximumf %87, %88 : vector<1x128xf32>
    %cst_44 = arith.constant 9.99999974E-6 : f32
    %90 = vector.broadcast %cst_44 : f32 to vector<1x128xf32>
    %91 = arith.addf %89, %90 : vector<1x128xf32>
    %92 = math.rsqrt %91 : vector<1x128xf32>
    %93 = arith.mulf %92, %75 : vector<1x128xf32>
    %94 = arith.mulf %83, %93 : vector<1x128xf32>
    %95 = arith.subf %76, %94 : vector<1x128xf32>
    %96 = vector.broadcast %93 : vector<1x128xf32> to vector<16x128xf32>
    %97 = arith.mulf %74, %96 : vector<16x128xf32>
    %98 = vector.broadcast %95 : vector<1x128xf32> to vector<16x128xf32>
    %99 = arith.addf %97, %98 : vector<16x128xf32>
    %cst_45 = arith.constant 0.000000e+00 : f32
    %100 = vector.broadcast %cst_45 : f32 to vector<16x128xf32>
    %101 = arith.maximumf %99, %100 : vector<16x128xf32>
    %102 = arith.truncf %101 : vector<16x128xf32> to vector<16x128xbf16>
    %c3_46 = arith.constant 3 : index
    %c0_47 = arith.constant 0 : index
    %c0_48 = arith.constant 0 : index
    %103 = vector.load %arg4[%c3_46, %c0_47, %c0_48] : memref<4x128x128xbf16, #tpu.memory_space<vmem>>, vector<1x128x128xbf16>
    %104 = vector.shape_cast %103 : vector<1x128x128xbf16> to vector<128x128xbf16>
    %cst_49 = arith.constant dense<0.000000e+00> : vector<16x128xf32>
    %105 = tpu.matmul %102, %104, %cst_49 {dimension_numbers = #tpu.dot_dimension_numbers<[1], [0], [0], [1], [0, 0, 1, 1], [], []>} : vector<16x128xbf16>, vector<128x128xbf16>, vector<16x128xf32> -> vector<16x128xf32>
    %c5 = arith.constant 5 : index
    %c0_50 = arith.constant 0 : index
    %106 = vector.load %arg6[%c5, %c0_50] : memref<9x128xf32, #tpu.memory_space<vmem>>, vector<1x128xf32>
    %c7 = arith.constant 7 : index
    %c0_51 = arith.constant 0 : index
    %107 = vector.load %arg6[%c7, %c0_51] : memref<9x128xf32, #tpu.memory_space<vmem>>, vector<1x128xf32>
    %cst_52 = arith.constant dense<0.000000e+00> : vector<128xf32>
    %108 = vector.multi_reduction <add>, %105, %cst_52 [0] : vector<16x128xf32> to vector<128xf32>
    %109 = vector.shape_cast %108 : vector<128xf32> to vector<1x128xf32>
    %110 = arith.mulf %105, %105 : vector<16x128xf32>
    %cst_53 = arith.constant dense<0.000000e+00> : vector<128xf32>
    %111 = vector.multi_reduction <add>, %110, %cst_53 [0] : vector<16x128xf32> to vector<128xf32>
    %112 = vector.shape_cast %111 : vector<128xf32> to vector<1x128xf32>
    %cst_54 = arith.constant 6.250000e-02 : f32
    %113 = vector.broadcast %cst_54 : f32 to vector<1x128xf32>
    %114 = arith.mulf %109, %113 : vector<1x128xf32>
    %cst_55 = arith.constant 6.250000e-02 : f32
    %115 = vector.broadcast %cst_55 : f32 to vector<1x128xf32>
    %116 = arith.mulf %112, %115 : vector<1x128xf32>
    %117 = arith.mulf %114, %114 : vector<1x128xf32>
    %118 = arith.subf %116, %117 : vector<1x128xf32>
    %cst_56 = arith.constant 0.000000e+00 : f32
    %119 = vector.broadcast %cst_56 : f32 to vector<1x128xf32>
    %120 = arith.maximumf %118, %119 : vector<1x128xf32>
    %cst_57 = arith.constant 9.99999974E-6 : f32
    %121 = vector.broadcast %cst_57 : f32 to vector<1x128xf32>
    %122 = arith.addf %120, %121 : vector<1x128xf32>
    %123 = math.rsqrt %122 : vector<1x128xf32>
    %124 = arith.mulf %123, %106 : vector<1x128xf32>
    %125 = arith.mulf %114, %124 : vector<1x128xf32>
    %126 = arith.subf %107, %125 : vector<1x128xf32>
    %127 = vector.broadcast %124 : vector<1x128xf32> to vector<16x128xf32>
    %128 = arith.mulf %105, %127 : vector<16x128xf32>
    %129 = vector.broadcast %126 : vector<1x128xf32> to vector<16x128xf32>
    %130 = arith.addf %128, %129 : vector<16x128xf32>
    %cst_58 = arith.constant 0.000000e+00 : f32
    %131 = vector.broadcast %cst_58 : f32 to vector<16x128xf32>
    %132 = arith.maximumf %130, %131 : vector<16x128xf32>
    %133 = arith.addf %68, %132 : vector<16x128xf32>
    %c0_59 = arith.constant 0 : index
    %c0_60 = arith.constant 0 : index
    %134 = vector.load %arg8[%c0_59, %c0_60] : memref<16x128xf32, #tpu.memory_space<vmem>>, vector<16x128xf32>
    tpu.vector_store %arg8[%c0_59, %c0_60], %133 {strides = array<i32>} : memref<16x128xf32, #tpu.memory_space<vmem>>, vector<16x128xf32>,
    %c16_i32 = arith.constant 16 : i32
    %135 = arith.muli %arg0, %c16_i32 : i32
    %c0_i32 = arith.constant 0 : i32
    %136 = arith.addi %135, %c0_i32 : i32
    %137 = arith.index_cast %136 : i32 to index
    %138 = memref.load %arg1[%137] : memref<64xi32, #tpu.memory_space<smem>>
    %c8_i32 = arith.constant 8 : i32
    %139 = arith.addi %135, %c8_i32 : i32
    %c0_i32_61 = arith.constant 0 : i32
    %140 = arith.addi %139, %c0_i32_61 : i32
    %141 = arith.index_cast %140 : i32 to index
    %142 = memref.load %arg1[%141] : memref<64xi32, #tpu.memory_space<smem>>
    %143 = arith.index_cast %138 : i32 to index
    %c0_62 = arith.constant 0 : index
    %144 = vector.load %arg8[%143, %c0_62] : memref<16x128xf32, #tpu.memory_space<vmem>>, vector<1x128xf32>
    %145 = arith.index_cast %142 : i32 to index
    %c0_63 = arith.constant 0 : index
    %146 = vector.load %arg8[%145, %c0_63] : memref<16x128xf32, #tpu.memory_space<vmem>>, vector<1x128xf32>
    %147 = tpu.concatenate %144, %146 in 1 : vector<1x128xf32>, vector<1x128xf32> -> vector<1x256xf32>
    %c1_i32 = arith.constant 1 : i32
    %148 = arith.addi %135, %c1_i32 : i32
    %149 = arith.index_cast %148 : i32 to index
    %150 = memref.load %arg1[%149] : memref<64xi32, #tpu.memory_space<smem>>
    %c8_i32_64 = arith.constant 8 : i32
    %151 = arith.addi %135, %c8_i32_64 : i32
    %c1_i32_65 = arith.constant 1 : i32
    %152 = arith.addi %151, %c1_i32_65 : i32
    %153 = arith.index_cast %152 : i32 to index
    %154 = memref.load %arg1[%153] : memref<64xi32, #tpu.memory_space<smem>>
    %155 = arith.index_cast %150 : i32 to index
    %c0_66 = arith.constant 0 : index
    %156 = vector.load %arg8[%155, %c0_66] : memref<16x128xf32, #tpu.memory_space<vmem>>, vector<1x128xf32>
    %157 = arith.index_cast %154 : i32 to index
    %c0_67 = arith.constant 0 : index
    %158 = vector.load %arg8[%157, %c0_67] : memref<16x128xf32, #tpu.memory_space<vmem>>, vector<1x128xf32>
    %159 = tpu.concatenate %156, %158 in 1 : vector<1x128xf32>, vector<1x128xf32> -> vector<1x256xf32>
    %c2_i32 = arith.constant 2 : i32
    %160 = arith.addi %135, %c2_i32 : i32
    %161 = arith.index_cast %160 : i32 to index
    %162 = memref.load %arg1[%161] : memref<64xi32, #tpu.memory_space<smem>>
    %c8_i32_68 = arith.constant 8 : i32
    %163 = arith.addi %135, %c8_i32_68 : i32
    %c2_i32_69 = arith.constant 2 : i32
    %164 = arith.addi %163, %c2_i32_69 : i32
    %165 = arith.index_cast %164 : i32 to index
    %166 = memref.load %arg1[%165] : memref<64xi32, #tpu.memory_space<smem>>
    %167 = arith.index_cast %162 : i32 to index
    %c0_70 = arith.constant 0 : index
    %168 = vector.load %arg8[%167, %c0_70] : memref<16x128xf32, #tpu.memory_space<vmem>>, vector<1x128xf32>
    %169 = arith.index_cast %166 : i32 to index
    %c0_71 = arith.constant 0 : index
    %170 = vector.load %arg8[%169, %c0_71] : memref<16x128xf32, #tpu.memory_space<vmem>>, vector<1x128xf32>
    %171 = tpu.concatenate %168, %170 in 1 : vector<1x128xf32>, vector<1x128xf32> -> vector<1x256xf32>
    %c3_i32 = arith.constant 3 : i32
    %172 = arith.addi %135, %c3_i32 : i32
    %173 = arith.index_cast %172 : i32 to index
    %174 = memref.load %arg1[%173] : memref<64xi32, #tpu.memory_space<smem>>
    %c8_i32_72 = arith.constant 8 : i32
    %175 = arith.addi %135, %c8_i32_72 : i32
    %c3_i32_73 = arith.constant 3 : i32
    %176 = arith.addi %175, %c3_i32_73 : i32
    %177 = arith.index_cast %176 : i32 to index
    %178 = memref.load %arg1[%177] : memref<64xi32, #tpu.memory_space<smem>>
    %179 = arith.index_cast %174 : i32 to index
    %c0_74 = arith.constant 0 : index
    %180 = vector.load %arg8[%179, %c0_74] : memref<16x128xf32, #tpu.memory_space<vmem>>, vector<1x128xf32>
    %181 = arith.index_cast %178 : i32 to index
    %c0_75 = arith.constant 0 : index
    %182 = vector.load %arg8[%181, %c0_75] : memref<16x128xf32, #tpu.memory_space<vmem>>, vector<1x128xf32>
    %183 = tpu.concatenate %180, %182 in 1 : vector<1x128xf32>, vector<1x128xf32> -> vector<1x256xf32>
    %c4_i32 = arith.constant 4 : i32
    %184 = arith.addi %135, %c4_i32 : i32
    %185 = arith.index_cast %184 : i32 to index
    %186 = memref.load %arg1[%185] : memref<64xi32, #tpu.memory_space<smem>>
    %c8_i32_76 = arith.constant 8 : i32
    %187 = arith.addi %135, %c8_i32_76 : i32
    %c4_i32_77 = arith.constant 4 : i32
    %188 = arith.addi %187, %c4_i32_77 : i32
    %189 = arith.index_cast %188 : i32 to index
    %190 = memref.load %arg1[%189] : memref<64xi32, #tpu.memory_space<smem>>
    %191 = arith.index_cast %186 : i32 to index
    %c0_78 = arith.constant 0 : index
    %192 = vector.load %arg8[%191, %c0_78] : memref<16x128xf32, #tpu.memory_space<vmem>>, vector<1x128xf32>
    %193 = arith.index_cast %190 : i32 to index
    %c0_79 = arith.constant 0 : index
    %194 = vector.load %arg8[%193, %c0_79] : memref<16x128xf32, #tpu.memory_space<vmem>>, vector<1x128xf32>
    %195 = tpu.concatenate %192, %194 in 1 : vector<1x128xf32>, vector<1x128xf32> -> vector<1x256xf32>
    %c5_i32 = arith.constant 5 : i32
    %196 = arith.addi %135, %c5_i32 : i32
    %197 = arith.index_cast %196 : i32 to index
    %198 = memref.load %arg1[%197] : memref<64xi32, #tpu.memory_space<smem>>
    %c8_i32_80 = arith.constant 8 : i32
    %199 = arith.addi %135, %c8_i32_80 : i32
    %c5_i32_81 = arith.constant 5 : i32
    %200 = arith.addi %199, %c5_i32_81 : i32
    %201 = arith.index_cast %200 : i32 to index
    %202 = memref.load %arg1[%201] : memref<64xi32, #tpu.memory_space<smem>>
    %203 = arith.index_cast %198 : i32 to index
    %c0_82 = arith.constant 0 : index
    %204 = vector.load %arg8[%203, %c0_82] : memref<16x128xf32, #tpu.memory_space<vmem>>, vector<1x128xf32>
    %205 = arith.index_cast %202 : i32 to index
    %c0_83 = arith.constant 0 : index
    %206 = vector.load %arg8[%205, %c0_83] : memref<16x128xf32, #tpu.memory_space<vmem>>, vector<1x128xf32>
    %207 = tpu.concatenate %204, %206 in 1 : vector<1x128xf32>, vector<1x128xf32> -> vector<1x256xf32>
    %c6_i32 = arith.constant 6 : i32
    %208 = arith.addi %135, %c6_i32 : i32
    %209 = arith.index_cast %208 : i32 to index
    %210 = memref.load %arg1[%209] : memref<64xi32, #tpu.memory_space<smem>>
    %c8_i32_84 = arith.constant 8 : i32
    %211 = arith.addi %135, %c8_i32_84 : i32
    %c6_i32_85 = arith.constant 6 : i32
    %212 = arith.addi %211, %c6_i32_85 : i32
    %213 = arith.index_cast %212 : i32 to index
    %214 = memref.load %arg1[%213] : memref<64xi32, #tpu.memory_space<smem>>
    %215 = arith.index_cast %210 : i32 to index
    %c0_86 = arith.constant 0 : index
    %216 = vector.load %arg8[%215, %c0_86] : memref<16x128xf32, #tpu.memory_space<vmem>>, vector<1x128xf32>
    %217 = arith.index_cast %214 : i32 to index
    %c0_87 = arith.constant 0 : index
    %218 = vector.load %arg8[%217, %c0_87] : memref<16x128xf32, #tpu.memory_space<vmem>>, vector<1x128xf32>
    %219 = tpu.concatenate %216, %218 in 1 : vector<1x128xf32>, vector<1x128xf32> -> vector<1x256xf32>
    %c7_i32 = arith.constant 7 : i32
    %220 = arith.addi %135, %c7_i32 : i32
    %221 = arith.index_cast %220 : i32 to index
    %222 = memref.load %arg1[%221] : memref<64xi32, #tpu.memory_space<smem>>
    %c8_i32_88 = arith.constant 8 : i32
    %223 = arith.addi %135, %c8_i32_88 : i32
    %c7_i32_89 = arith.constant 7 : i32
    %224 = arith.addi %223, %c7_i32_89 : i32
    %225 = arith.index_cast %224 : i32 to index
    %226 = memref.load %arg1[%225] : memref<64xi32, #tpu.memory_space<smem>>
    %227 = arith.index_cast %222 : i32 to index
    %c0_90 = arith.constant 0 : index
    %228 = vector.load %arg8[%227, %c0_90] : memref<16x128xf32, #tpu.memory_space<vmem>>, vector<1x128xf32>
    %229 = arith.index_cast %226 : i32 to index
    %c0_91 = arith.constant 0 : index
    %230 = vector.load %arg8[%229, %c0_91] : memref<16x128xf32, #tpu.memory_space<vmem>>, vector<1x128xf32>
    %231 = tpu.concatenate %228, %230 in 1 : vector<1x128xf32>, vector<1x128xf32> -> vector<1x256xf32>
    %232 = tpu.concatenate %147, %159, %171, %183, %195, %207, %219, %231 in 0 : vector<1x256xf32>, vector<1x256xf32>, vector<1x256xf32>, vector<1x256xf32>, vector<1x256xf32>, vector<1x256xf32>, vector<1x256xf32>, vector<1x256xf32> -> vector<8x256xf32>
    %c0_92 = arith.constant 0 : index
    %c0_93 = arith.constant 0 : index
    %233 = vector.load %arg9[%c0_92, %c0_93] : memref<8x256xf32, #tpu.memory_space<vmem>>, vector<8x256xf32>
    tpu.vector_store %arg9[%c0_92, %c0_93], %232 {strides = array<i32>} : memref<8x256xf32, #tpu.memory_space<vmem>>, vector<8x256xf32>,
    %c0_94 = arith.constant 0 : index
    %c0_95 = arith.constant 0 : index
    %234 = vector.load %arg9[%c0_94, %c0_95] : memref<8x256xf32, #tpu.memory_space<vmem>>, vector<8x256xf32>
    %235 = arith.truncf %234 : vector<8x256xf32> to vector<8x256xbf16>
    %c0_96 = arith.constant 0 : index
    %c0_97 = arith.constant 0 : index
    %236 = vector.load %arg5[%c0_96, %c0_97] : memref<256x128xbf16, #tpu.memory_space<vmem>>, vector<256x128xbf16>
    %cst_98 = arith.constant dense<0.000000e+00> : vector<8x128xf32>
    %237 = tpu.matmul %235, %236, %cst_98 {dimension_numbers = #tpu.dot_dimension_numbers<[1], [0], [0], [1], [0, 0, 1, 1], [], []>} : vector<8x256xbf16>, vector<256x128xbf16>, vector<8x128xf32> -> vector<8x128xf32>
    %c8 = arith.constant 8 : index
    %c0_99 = arith.constant 0 : index
    %238 = vector.load %arg6[%c8, %c0_99] : memref<9x128xf32, #tpu.memory_space<vmem>>, vector<1x128xf32>
    %239 = vector.broadcast %238 : vector<1x128xf32> to vector<8x128xf32>
    %240 = arith.addf %237, %239 : vector<8x128xf32>
    %c0_100 = arith.constant 0 : index
    %c0_101 = arith.constant 0 : index
    %c0_102 = arith.constant 0 : index
    %241 = vector.load %arg7[%c0_100, %c0_101, %c0_102] : memref<1x8x128xf32, #tpu.memory_space<vmem>>, vector<1x8x128xf32>
    %242 = vector.shape_cast %241 : vector<1x8x128xf32> to vector<8x128xf32>
    %243 = vector.shape_cast %240 : vector<8x128xf32> to vector<1x8x128xf32>
    tpu.vector_store %arg7[%c0_100, %c0_101, %c0_102], %243 {strides = array<i32>} : memref<1x8x128xf32, #tpu.memory_space<vmem>>, vector<1x8x128xf32>,
    return
  }
  func.func @transform_0(%arg0: i32, %arg1: memref<64xi32, #tpu.memory_space<smem>>) -> (i32, i32, i32) {
    %c0_i32 = arith.constant 0 : i32
    %c0_i32_0 = arith.constant 0 : i32
    %c0_i32_1 = arith.constant 0 : i32
    return %arg0, %c0_i32, %c0_i32_0 : i32, i32, i32
  }
  func.func @transform_1(%arg0: i32, %arg1: memref<64xi32, #tpu.memory_space<smem>>) -> (i32, i32, i32) {
    %c0_i32 = arith.constant 0 : i32
    %c0_i32_0 = arith.constant 0 : i32
    %c0_i32_1 = arith.constant 0 : i32
    return %arg0, %c0_i32, %c0_i32_0 : i32, i32, i32
  }
  func.func @transform_2(%arg0: i32, %arg1: memref<64xi32, #tpu.memory_space<smem>>) -> (i32, i32, i32) {
    %c0_i32 = arith.constant 0 : i32
    %c0_i32_0 = arith.constant 0 : i32
    %c0_i32_1 = arith.constant 0 : i32
    %c0_i32_2 = arith.constant 0 : i32
    return %c0_i32, %c0_i32_0, %c0_i32_1 : i32, i32, i32
  }
  func.func @transform_3(%arg0: i32, %arg1: memref<64xi32, #tpu.memory_space<smem>>) -> (i32, i32) {
    %c0_i32 = arith.constant 0 : i32
    %c0_i32_0 = arith.constant 0 : i32
    %c0_i32_1 = arith.constant 0 : i32
    return %c0_i32, %c0_i32_0 : i32, i32
  }
  func.func @transform_4(%arg0: i32, %arg1: memref<64xi32, #tpu.memory_space<smem>>) -> (i32, i32) {
    %c0_i32 = arith.constant 0 : i32
    %c0_i32_0 = arith.constant 0 : i32
    %c0_i32_1 = arith.constant 0 : i32
    return %c0_i32, %c0_i32_0 : i32, i32
  }
  func.func @transform_5(%arg0: i32, %arg1: memref<64xi32, #tpu.memory_space<smem>>) -> (i32, i32, i32) {
    %c0_i32 = arith.constant 0 : i32
    %c0_i32_0 = arith.constant 0 : i32
    %c0_i32_1 = arith.constant 0 : i32
    return %arg0, %c0_i32, %c0_i32_0 : i32, i32, i32
  }
}

</mosaic_0001>

<llo_original>
// kernel: tpu_custom_call.1
$region0: #{tpu_custom_call.1}
  #allocation0 [shape = 'u32[]', space=smem, size = 0x4, offset = 0x4, fixed_abs, tag = 'smem constant byte address 0x4 - core index']
  #allocation1 [shape = 'u32[144,128]{1,0:T(1,128)}', space=vmem, size = 0x12000, scoped, tag = 'internal scratch']
  #allocation2 [shape = 'f32[16,128]{1,0:T(8,128)}', space=vmem, size = 0x2000, scoped, tag = 'scratch operand']
  #allocation3 [shape = 'f32[8,256]{1,0:T(8,128)}', space=vmem, size = 0x2000, scoped, tag = 'scratch operand']
  #allocation4 [shape = 's32[1]{0}', space=sflag, size = 0x4, scoped, tag = 'scoped memory for tpu_custom_call.1']
  #allocation5 [shape = 'u8[512]{0}', space=smem, size = 0x200, scoped, tag = 'prefetched SMEM operand 0']
  %s0 = inlined_call_operand.hbm [shape: s32[64], index: 0, kind: input, shape index: {}]
  %s1 = inlined_call_operand.hbm [shape: bf16[4,16,128], index: 1, kind: input, shape index: {}]
  %s2 = inlined_call_operand.hbm [shape: bf16[4,16,16], index: 2, kind: input, shape index: {}]
  %s3 = inlined_call_operand.hbm [shape: bf16[4,128,128], index: 3, kind: input, shape index: {}]
  %s4 = inlined_call_operand.hbm [shape: bf16[256,128], index: 4, kind: input, shape index: {}]
  %s5 = inlined_call_operand.vmem [shape: f32[9,128], index: 5, kind: input, shape index: {}]
  %s6 = inlined_call_operand.hbm [shape: f32[4,8,128], index: 6, kind: output, shape index: {}]
  %s7 = sld [smem:[#allocation0]]
  $region69: #{tpu_custom_call.1} parent=0
    _
  %s9 = ssub.s32 1, %s7
  %s10 = scalar_select 0, %s9, %s7
  %12 = dma.hbm_to_smem %s0, 16, [#allocation5], [#allocation4]
  %13 = dma.done [#allocation4], 16
  %14 = sfence
  $region1: #{tpu_custom_call.1} parent=0
    #allocation6 [shape = 'u8[8192]{0}', space=vmem, size = 0x2000, scoped, tag = 'input window, operand 1']
    #allocation7 [shape = 's32[2]{0}', space=sflag, size = 0x8, scoped, tag = 'scoped memory for tpu_custom_call.1']
    #allocation8 [shape = 's32[2]{0}', space=sflag, size = 0x8, scoped, tag = 'scoped memory for tpu_custom_call.1']
    #allocation9 [shape = 'u8[8192]{0}', space=vmem, size = 0x2000, scoped, tag = 'input window, operand 2']
    #allocation10 [shape = 's32[2]{0}', space=sflag, size = 0x8, scoped, tag = 'scoped memory for tpu_custom_call.1']
    #allocation11 [shape = 'u8[131072]{0}', space=vmem, size = 0x20000, scoped, tag = 'input window, operand 3, single buffered']
    #allocation12 [shape = 'u8[65536]{0}', space=vmem, size = 0x10000, scoped, tag = 'input window, operand 4, single buffered']
    #allocation13 [shape = 's32[1]{0}', space=sflag, size = 0x4, scoped, tag = 'scoped memory for tpu_custom_call.1']
    #allocation14 [shape = 'u8[8192]{0}', space=vmem, size = 0x2000, scoped, tag = 'output window, operand 0']
    %15 = vsyncpa [#allocation7], 0
    %s16 = scalar_lea.sflag [#allocation7], 1
    %17 = vsyncpa %s16, 0
    %18 = vsyncpa [#allocation10], 0
    %s19 = scalar_lea.sflag [#allocation10], 1
    %20 = vsyncpa %s19, 0
    %21 = vsyncpa [#allocation13], 0
    %22 = vsyncpa [#allocation8], 0
    %s23 = scalar_lea.sflag [#allocation8], 1
    %24 = vsyncpa %s23, 0
    loop: start=0, step=1, limit=6
    $region2: #{tpu_custom_call.1} parent=1 // loop_pre_header
      _
    $region3: #{tpu_custom_call.1} parent=1 // loop_header
      %s26 = sphi 0, %s30
      %p27 = scmp.ge.s32.totalorder %s26, 6
      %s36 = sphi 0, %s38
      %s39 = sphi 0, %s36
      %s40 = sphi 0, %s39
      %s56 = sphi 0, %s40
      %s62 = sphi 0, %s64
      %s65 = sphi 0, %s62
      %s66 = sphi 0, %s65
      %s82 = sphi 0, %s66
      %s86 = sphi 0, %s86
      %s88 = sphi 0, %s86
      %s89 = sphi 0, %s88
      %s103 = sphi 0, %s89
      %s107 = sphi 0, %s107
      %s109 = sphi 0, %s107
      %s110 = sphi 0, %s109
      %s124 = sphi 0, %s110
      %s128 = sphi 0, %s128
      %s130 = sphi 0, %s128
      %s131 = sphi 0, %s130
      %s145 = sphi 0, %s131
      %s151 = sphi 0, %s153
      %s154 = sphi 0, %s151
      %s155 = sphi 0, %s154
      %s171 = sphi 0, %s155
    $region4: #{tpu_custom_call.1} parent=1 // loop_header_branch
      %29 = sbr.rel (%p27) target = $region8
    $region5: #{tpu_custom_call.1} parent=1 // loop_body
      %s31 = ssub.s32 %s26, 1
      %s32 = ssub.s32 %s26, 2
      %s33 = sadd.s32 %s26, 1
      %s34 = ssub.s32 %s26, %s33
      %p35 = scmp.eq.s32.totalorder %s34, 0
      %s37 = sadd.s32 %s36, 1
      %s38 = scalar_select %p35, %s36, %s37
      %p41 = pneg %p35
      %p42 = scmp.eq.s32.totalorder %s26, 3
      %p43 = por %p41, %p42
      %p44 = scmp.ne.s32.totalorder %s36, %s39
      %p45 = scmp.eq.s32.totalorder %s26, 0
      %p46 = por %p44, %p45
      %p47 = scmp.ne.s32.totalorder %s36, %s39
      %p48 = scmp.eq.s32.totalorder %s31, 3
      %p49 = por %p47, %p48
      %p50 = scmp.ne.s32.totalorder %s39, %s40
      %p51 = scmp.eq.s32.totalorder %s31, 0
      %p52 = por %p50, %p51
      %p53 = scmp.ne.s32.totalorder %s39, %s40
      %p54 = scmp.eq.s32.totalorder %s32, 3
      %p55 = por %p53, %p54
      %p57 = scmp.ne.s32.totalorder %s40, %s56
      %p58 = scmp.eq.s32.totalorder %s32, 0
      %p59 = por %p57, %p58
      %s60 = ssub.s32 %s26, %s33
      %p61 = scmp.eq.s32.totalorder %s60, 0
      %s63 = sadd.s32 %s62, 1
      %s64 = scalar_select %p61, %s62, %s63
      %p67 = pneg %p61
      %p68 = scmp.eq.s32.totalorder %s26, 3
      %p69 = por %p67, %p68
      %p70 = scmp.ne.s32.totalorder %s62, %s65
      %p71 = scmp.eq.s32.totalorder %s26, 0
      %p72 = por %p70, %p71
      %p73 = scmp.ne.s32.totalorder %s62, %s65
      %p74 = scmp.eq.s32.totalorder %s31, 3
      %p75 = por %p73, %p74
      %p76 = scmp.ne.s32.totalorder %s65, %s66
      %p77 = scmp.eq.s32.totalorder %s31, 0
      %p78 = por %p76, %p77
      %p79 = scmp.ne.s32.totalorder %s65, %s66
      %p80 = scmp.eq.s32.totalorder %s32, 3
      %p81 = por %p79, %p80
      %p83 = scmp.ne.s32.totalorder %s66, %s82
      %p84 = scmp.eq.s32.totalorder %s32, 0
      %p85 = por %p83, %p84
      %s87 = sadd.s32 %s86, 1
      %p90 = scmp.eq.s32.totalorder %s26, 3
      %p91 = scmp.ne.s32.totalorder %s86, %s88
      %p92 = scmp.eq.s32.totalorder %s26, 0
      %p93 = por %p91, %p92
      %p94 = scmp.ne.s32.totalorder %s86, %s88
      %p95 = scmp.eq.s32.totalorder %s31, 3
      %p96 = por %p94, %p95
      %p97 = scmp.ne.s32.totalorder %s88, %s89
      %p98 = scmp.eq.s32.totalorder %s31, 0
      %p99 = por %p97, %p98
      %p100 = scmp.ne.s32.totalorder %s88, %s89
      %p101 = scmp.eq.s32.totalorder %s32, 3
      %p102 = por %p100, %p101
      %p104 = scmp.ne.s32.totalorder %s89, %s103
      %p105 = scmp.eq.s32.totalorder %s32, 0
      %p106 = por %p104, %p105
      %s108 = sadd.s32 %s107, 1
      %p111 = scmp.eq.s32.totalorder %s26, 3
      %p112 = scmp.ne.s32.totalorder %s107, %s109
      %p113 = scmp.eq.s32.totalorder %s26, 0
      %p114 = por %p112, %p113
      %p115 = scmp.ne.s32.totalorder %s107, %s109
      %p116 = scmp.eq.s32.totalorder %s31, 3
      %p117 = por %p115, %p116
      %p118 = scmp.ne.s32.totalorder %s109, %s110
      %p119 = scmp.eq.s32.totalorder %s31, 0
      %p120 = por %p118, %p119
      %p121 = scmp.ne.s32.totalorder %s109, %s110
      %p122 = scmp.eq.s32.totalorder %s32, 3
      %p123 = por %p121, %p122
      %p125 = scmp.ne.s32.totalorder %s110, %s124
      %p126 = scmp.eq.s32.totalorder %s32, 0
      %p127 = por %p125, %p126
      %s129 = sadd.s32 %s128, 1
      %p132 = scmp.eq.s32.totalorder %s26, 3
      %p133 = scmp.ne.s32.totalorder %s128, %s130
      %p134 = scmp.eq.s32.totalorder %s26, 0
      %p135 = por %p133, %p134
      %p136 = scmp.ne.s32.totalorder %s128, %s130
      %p137 = scmp.eq.s32.totalorder %s31, 3
      %p138 = por %p136, %p137
      %p139 = scmp.ne.s32.totalorder %s130, %s131
      %p140 = scmp.eq.s32.totalorder %s31, 0
      %p141 = por %p139, %p140
      %p142 = scmp.ne.s32.totalorder %s130, %s131
      %p143 = scmp.eq.s32.totalorder %s32, 3
      %p144 = por %p142, %p143
      %p146 = scmp.ne.s32.totalorder %s131, %s145
      %p147 = scmp.eq.s32.totalorder %s32, 0
      %p148 = por %p146, %p147
      %s149 = ssub.s32 %s26, %s33
      %p150 = scmp.eq.s32.totalorder %s149, 0
      %s152 = sadd.s32 %s151, 1
      %s153 = scalar_select %p150, %s151, %s152
      %p156 = pneg %p150
      %p157 = scmp.eq.s32.totalorder %s26, 3
      %p158 = por %p156, %p157
      %p159 = scmp.ne.s32.totalorder %s151, %s154
      %p160 = scmp.eq.s32.totalorder %s26, 0
      %p161 = por %p159, %p160
      %p162 = scmp.ne.s32.totalorder %s151, %s154
      %p163 = scmp.eq.s32.totalorder %s31, 3
      %p164 = por %p162, %p163
      %p165 = scmp.ne.s32.totalorder %s154, %s155
      %p166 = scmp.eq.s32.totalorder %s31, 0
      %p167 = por %p165, %p166
      %p168 = scmp.ne.s32.totalorder %s154, %s155
      %p169 = scmp.eq.s32.totalorder %s32, 3
      %p170 = por %p168, %p169
      %p172 = scmp.ne.s32.totalorder %s155, %s171
      %p173 = scmp.eq.s32.totalorder %s32, 0
      %p174 = por %p172, %p173
      %p175 = scmp.le.s32.totalorder 1, %s26
      %p176 = scmp.lt.s32.totalorder %s26, 5
      %p177 = pnand %p175, %p176
      %p178 = pneg %p177
      // Predicated region
      $region9: #{tpu_custom_call.1} parent=5 // pred_check
        _
      $region10: #{tpu_custom_call.1} parent=5 // pred_check_branch
        %180 = sbr.rel (%p177) target = $region12
      $region11: #{tpu_custom_call.1} parent=5 // pred_region
        %s181 = ssub.s32 %s26, 1
        // Predicated region
        $region13: #{tpu_custom_call.1} parent=11 // pred_check
          %p182 = pneg %p99
        $region14: #{tpu_custom_call.1} parent=11 // pred_check_branch
          %184 = sbr.rel (%p182) target = $region16
        $region15: #{tpu_custom_call.1} parent=11 // pred_region
          %s186 = ssub.s32 4096, 4096
          %187 = vsyncadd [#allocation10], %s186
          %s188 = sshll.u32 [#allocation11], 4
          %s189 = int_to_ptr.vmem [resolvable:$true] %s188
          %194 = dma.hbm_to_vmem [thread:$0]  %s3, 4096, %s189, [#allocation10], 64, 64, 4
        $region16: #{tpu_custom_call.1} parent=11 // pred_fallthru
          _
        // Predicated region
        $region17: #{tpu_custom_call.1} parent=11 // pred_check
          %p195 = pneg %p120
        $region18: #{tpu_custom_call.1} parent=11 // pred_check_branch
          %197 = sbr.rel (%p195) target = $region20
        $region19: #{tpu_custom_call.1} parent=11 // pred_region
          %s199 = ssub.s32 2048, 2048
          %200 = vsyncadd [#allocation13], %s199
          %s201 = sshll.u32 [#allocation12], 4
          %s202 = int_to_ptr.vmem [resolvable:$true] %s201
          %207 = dma.hbm_to_vmem [thread:$0]  %s4, 2048, %s202, [#allocation13], 64, 64, 4
        $region20: #{tpu_custom_call.1} parent=11 // pred_fallthru
          _
        // Predicated region
        $region21: #{tpu_custom_call.1} parent=11 // pred_check
          %p208 = pneg %p141
        $region22: #{tpu_custom_call.1} parent=11 // pred_check_branch
          %210 = sbr.rel (%p208) target = $region24
        $region23: #{tpu_custom_call.1} parent=11 // pred_region
          _
        $region24: #{tpu_custom_call.1} parent=11 // pred_fallthru
          _
      $region12: #{tpu_custom_call.1} parent=5 // pred_fallthru
        _
      %p211 = scmp.lt.s32.totalorder %s26, 4
      // Predicated region
      $region25: #{tpu_custom_call.1} parent=5 // pred_check
        %p212 = pneg %p211
      $region26: #{tpu_custom_call.1} parent=5 // pred_check_branch
        %214 = sbr.rel (%p212) target = $region28
      $region27: #{tpu_custom_call.1} parent=5 // pred_region
        // Predicated region
        $region29: #{tpu_custom_call.1} parent=27 // pred_check
          %p215 = pneg %p46
        $region30: #{tpu_custom_call.1} parent=27 // pred_check_branch
          %217 = sbr.rel (%p215) target = $region32
        $region31: #{tpu_custom_call.1} parent=27 // pred_region
          %s218 = sand.u32 %s36, 1
          %s219 = scalar_lea.sflag [#allocation7], %s218
          %s220 = sand.u32 %s36, 1
          %s221 = smul.addr %s220, 8
          %s222 = scalar_lea.vmem [#allocation6], %s221
          %s224 = ssub.s32 128, 128
          %225 = vsyncadd %s219, %s224
          %s226 = smul.addr %s26, 2
          %s227 = smul.addr %s226, 64
          %s228 = scalar_lea.hbm %s1, %s227
          %s229 = sshll.u32 %s222, 4
          %s230 = int_to_ptr.vmem [resolvable:$true] %s229
          %235 = dma.hbm_to_vmem [thread:$0]  %s228, 128, %s230, %s219, 64, 64, 4
        $region32: #{tpu_custom_call.1} parent=27 // pred_fallthru
          _
        // Predicated region
        $region33: #{tpu_custom_call.1} parent=27 // pred_check
          %p236 = pneg %p72
        $region34: #{tpu_custom_call.1} parent=27 // pred_check_branch
          %238 = sbr.rel (%p236) target = $region36
        $region35: #{tpu_custom_call.1} parent=27 // pred_region
          %s239 = sand.u32 %s26, 1
          %s240 = scalar_lea.sflag [#allocation10], %s239
          %s241 = sand.u32 %s62, 1
          %s242 = smul.addr %s241, 8
          %s243 = scalar_lea.vmem [#allocation9], %s242
          %s245 = ssub.s32 128, 128
          %246 = vsyncadd %s240, %s245
          %s247 = smul.addr %s26, 2
          %s248 = smul.addr %s247, 64
          %s249 = scalar_lea.hbm %s2, %s248
          %s250 = sshll.u32 %s243, 4
          %s251 = int_to_ptr.vmem [resolvable:$true] %s250
          %256 = dma.hbm_to_vmem [thread:$0]  %s249, 128, %s251, %s240, 64, 64, 4
        $region36: #{tpu_custom_call.1} parent=27 // pred_fallthru
          _
      $region28: #{tpu_custom_call.1} parent=5 // pred_fallthru
        _
      %p257 = scmp.le.s32.totalorder 1, %s26
      %p258 = scmp.lt.s32.totalorder %s26, 5
      %p259 = pnand %p257, %p258
      %p260 = pneg %p259
      // Predicated region
      $region37: #{tpu_custom_call.1} parent=5 // pred_check
        _
      $region38: #{tpu_custom_call.1} parent=5 // pred_check_branch
        %262 = sbr.rel (%p259) target = $region40
      $region39: #{tpu_custom_call.1} parent=5 // pred_region
        %s263 = ssub.s32 %s26, 1
        %s264 = sand.u32 %s39, 1
        %s265 = scalar_lea.sflag [#allocation7], %s264
        %s266 = sand.u32 %s39, 1
        %s267 = smul.addr %s266, 8
        %s268 = scalar_lea.vmem [#allocation6], %s267
        // Predicated region
        $region41: #{tpu_custom_call.1} parent=39 // pred_check
          %p269 = pneg %p52
        $region42: #{tpu_custom_call.1} parent=39 // pred_check_branch
          %271 = sbr.rel (%p269) target = $region44
        $region43: #{tpu_custom_call.1} parent=39 // pred_region
          %272 = dma.done %s265, 128
        $region44: #{tpu_custom_call.1} parent=39 // pred_fallthru
          _
        %s273 = sand.u32 %s31, 1
        %s274 = scalar_lea.sflag [#allocation10], %s273
        %s275 = sand.u32 %s65, 1
        %s276 = smul.addr %s275, 8
        %s277 = scalar_lea.vmem [#allocation9], %s276
        // Predicated region
        $region45: #{tpu_custom_call.1} parent=39 // pred_check
          %p278 = pneg %p78
        $region46: #{tpu_custom_call.1} parent=39 // pred_check_branch
          %280 = sbr.rel (%p278) target = $region48
        $region47: #{tpu_custom_call.1} parent=39 // pred_region
          %281 = dma.done %s274, 128
        $region48: #{tpu_custom_call.1} parent=39 // pred_fallthru
          _
        // Predicated region
        $region49: #{tpu_custom_call.1} parent=39 // pred_check
          %p282 = pneg %p99
        $region50: #{tpu_custom_call.1} parent=39 // pred_check_branch
          %284 = sbr.rel (%p282) target = $region52
        $region51: #{tpu_custom_call.1} parent=39 // pred_region
          %285 = dma.done [#allocation10], 4096
        $region52: #{tpu_custom_call.1} parent=39 // pred_fallthru
          _
        // Predicated region
        $region53: #{tpu_custom_call.1} parent=39 // pred_check
          %p286 = pneg %p120
        $region54: #{tpu_custom_call.1} parent=39 // pred_check_branch
          %288 = sbr.rel (%p286) target = $region56
        $region55: #{tpu_custom_call.1} parent=39 // pred_region
          %289 = dma.done [#allocation13], 2048
        $region56: #{tpu_custom_call.1} parent=39 // pred_fallthru
          _
        %s290 = sand.u32 %s39, 1
        %s291 = scalar_lea.sflag [#allocation7], %s290
        %s292 = sand.u32 %s39, 1
        %s293 = smul.addr %s292, 8
        %s294 = scalar_lea.vmem [#allocation6], %s293
        %p295 = pneg %p52
        %p296 = pneg %p49
        %s297 = sand.u32 %s31, 1
        %s298 = scalar_lea.sflag [#allocation10], %s297
        %s299 = sand.u32 %s65, 1
        %s300 = smul.addr %s299, 8
        %s301 = scalar_lea.vmem [#allocation9], %s300
        %p302 = pneg %p78
        %p303 = pneg %p75
        %p304 = pneg %p99
        %p305 = pneg %p96
        %p306 = pneg %p120
        %p307 = pneg %p117
        %p308 = pneg %p141
        %p309 = pneg %p138
        %p310 = pneg %p167
        %p311 = pneg %p164
        %s312 = sand.u32 %s154, 1
        %s313 = scalar_lea.sflag [#allocation8], %s312
        %s314 = sand.u32 %s154, 1
        %s315 = smul.addr %s314, 8
        %s316 = scalar_lea.vmem [#allocation14], %s315
        %v318 = vld [vmem:[%s268] sm:$0xf]
        %v319 = vld [vmem:[%s268 + $0x4] sm:$0xf]
        %v320 = vld [vmem:[%s277] sm:$0xf]
        %v321 = vld [vmem:[%s277 + $0x4] sm:$0xf]
        %v322 = vunpack.c.l.bf16 %v318
        %v323 = vunpack.c.l.bf16 %v319
        %v326 = vunpack.c.l.b16 %v320
        %v327 = vunpack.c.l.b16 %v321
        %v328 = vpack.c.b16 %v327, %v326
        %v331 = vunpack.c.l.b16 %v318
        %v332 = vunpack.c.l.b16 %v319
        %v333 = vpack.c.b16 %v332, %v331
        %vm335 = vcmask 130048
        %v337 = vsel %vm335, %v328, 0
        %339 = vmatprep.subr.bf16.mxu0 0
        %340 = vmatpush1.bf16.msra.mxu0 %v333
        %341 = vmatprep.subr.bf16.mxu0 0
        %342 = vmatpush1.bf16.msra.mxu0 0
        %343 = vmatprep.subr.bf16.mxu0 0
        %344 = vmatpush1.bf16.msra.mxu0 0
        %345 = vmatprep.subr.bf16.mxu0 0
        %346 = vmatpush1.bf16.msra.mxu0 0
        %347 = vmatprep.subr.bf16.mxu0 0
        %348 = vmatpush1.bf16.msra.mxu0 0
        %349 = vmatprep.subr.bf16.mxu0 0
        %350 = vmatpush1.bf16.msra.mxu0 0
        %351 = vmatprep.subr.bf16.mxu0 0
        %352 = vmatpush1.bf16.msra.mxu0 0
        %353 = vmatprep.subr.bf16.mxu0 0
        %354 = vmatpush1.bf16.msra.mxu0 0
        %355 = vmatprep.subr.bf16.mxu0 0
        %356 = vmatpush1.bf16.msra.mxu0 0
        %357 = vmatprep.subr.bf16.mxu0 0
        %358 = vmatpush1.bf16.msra.mxu0 0
        %359 = vmatprep.subr.bf16.mxu0 0
        %360 = vmatpush1.bf16.msra.mxu0 0
        %361 = vmatprep.subr.bf16.mxu0 0
        %362 = vmatpush1.bf16.msra.mxu0 0
        %363 = vmatprep.subr.bf16.mxu0 0
        %364 = vmatpush1.bf16.msra.mxu0 0
        %365 = vmatprep.subr.bf16.mxu0 0
        %366 = vmatpush1.bf16.msra.mxu0 0
        %367 = vmatprep.subr.bf16.mxu0 0
        %368 = vmatpush1.bf16.msra.mxu0 0
        %369 = vmatprep.subr.bf16.mxu0 0
        %370 = vmatpush1.bf16.msra.mxu0 0
        %371 = vmatprep.mubr.bf16.mxu0 0
        %372 = vmatmul.mubr.bf16.gmra.mrb[0].mxu0 %v337
        %v373 = vpop.f32.mrb[0].mxu0
        %v374 = vadd.f32 0.0, %v373
        %v375 = vpop.f32.mrb[0].mxu0
        %v376 = vpop.f32.mrb[0].mxu0
        %v377 = vadd.f32 0.0, %v376
        %v378 = vpop.f32.mrb[0].mxu0
        %379 = vdwg.mxu0
        %v380 = vpack.c.bf16 %v377, %v374
        %v381 = vld [vmem:[#allocation11] sm:$0xf]
        %v382 = vld [vmem:[#allocation11 + $0x4] sm:$0xf]
        %v383 = vld [vmem:[#allocation11 + $0x8] sm:$0xf]
        %v384 = vld [vmem:[#allocation11 + $0xc] sm:$0xf]
        %v385 = vld [vmem:[#allocation11 + $0x10] sm:$0xf]
        %v386 = vld [vmem:[#allocation11 + $0x14] sm:$0xf]
        %v387 = vld [vmem:[#allocation11 + $0x18] sm:$0xf]
        %v388 = vld [vmem:[#allocation11 + $0x1c] sm:$0xf]
        %v389 = vld [vmem:[#allocation11 + $0x20] sm:$0xf]
        %v390 = vld [vmem:[#allocation11 + $0x24] sm:$0xf]
        %v391 = vld [vmem:[#allocation11 + $0x28] sm:$0xf]
        %v392 = vld [vmem:[#allocation11 + $0x2c] sm:$0xf]
        %v393 = vld [vmem:[#allocation11 + $0x30] sm:$0xf]
        %v394 = vld [vmem:[#allocation11 + $0x34] sm:$0xf]
        %v395 = vld [vmem:[#allocation11 + $0x38] sm:$0xf]
        %v396 = vld [vmem:[#allocation11 + $0x3c] sm:$0xf]
        %v413 = vunpack.c.l.b16 %v381
        %v414 = vunpack.c.l.b16 %v382
        %v415 = vunpack.c.l.b16 %v383
        %v416 = vunpack.c.l.b16 %v384
        %v417 = vunpack.c.l.b16 %v385
        %v418 = vunpack.c.l.b16 %v386
        %v419 = vunpack.c.l.b16 %v387
        %v420 = vunpack.c.l.b16 %v388
        %v421 = vunpack.c.l.b16 %v389
        %v422 = vunpack.c.l.b16 %v390
        %v423 = vunpack.c.l.b16 %v391
        %v424 = vunpack.c.l.b16 %v392
        %v425 = vunpack.c.l.b16 %v393
        %v426 = vunpack.c.l.b16 %v394
        %v427 = vunpack.c.l.b16 %v395
        %v428 = vunpack.c.l.b16 %v396
        %v429 = vpack.c.b16 %v414, %v413
        %v430 = vpack.c.b16 %v416, %v415
        %v431 = vpack.c.b16 %v418, %v417
        %v432 = vpack.c.b16 %v420, %v419
        %v433 = vpack.c.b16 %v422, %v421
        %v434 = vpack.c.b16 %v424, %v423
        %v435 = vpack.c.b16 %v426, %v425
        %v436 = vpack.c.b16 %v428, %v427
        %445 = vmatprep.subr.bf16.mxu0 0
        %446 = vmatpush1.bf16.msra.mxu0 %v429
        %447 = vmatprep.subr.bf16.mxu0 0
        %448 = vmatpush1.bf16.msra.mxu0 %v430
        %449 = vmatprep.subr.bf16.mxu0 0
        %450 = vmatpush1.bf16.msra.mxu0 %v431
        %451 = vmatprep.subr.bf16.mxu0 0
        %452 = vmatpush1.bf16.msra.mxu0 %v432
        %453 = vmatprep.subr.bf16.mxu0 0
        %454 = vmatpush1.bf16.msra.mxu0 %v433
        %455 = vmatprep.subr.bf16.mxu0 0
        %456 = vmatpush1.bf16.msra.mxu0 %v434
        %457 = vmatprep.subr.bf16.mxu0 0
        %458 = vmatpush1.bf16.msra.mxu0 %v435
        %459 = vmatprep.subr.bf16.mxu0 0
        %460 = vmatpush1.bf16.msra.mxu0 %v436
        %461 = vmatprep.subr.bf16.mxu0 0
        %462 = vmatpush1.bf16.msra.mxu0 0
        %463 = vmatprep.subr.bf16.mxu0 0
        %464 = vmatpush1.bf16.msra.mxu0 0
        %465 = vmatprep.subr.bf16.mxu0 0
        %466 = vmatpush1.bf16.msra.mxu0 0
        %467 = vmatprep.subr.bf16.mxu0 0
        %468 = vmatpush1.bf16.msra.mxu0 0
        %469 = vmatprep.subr.bf16.mxu0 0
        %470 = vmatpush1.bf16.msra.mxu0 0
        %471 = vmatprep.subr.bf16.mxu0 0
        %472 = vmatpush1.bf16.msra.mxu0 0
        %473 = vmatprep.subr.bf16.mxu0 0
        %474 = vmatpush1.bf16.msra.mxu0 0
        %475 = vmatprep.subr.bf16.mxu0 0
        %476 = vmatpush1.bf16.msra.mxu0 0
        %477 = vmatprep.mubr.bf16.mxu0 0
        %478 = vmatmul.mubr.bf16.gmra.mrb[0].mxu0 %v380
        %v479 = vpop.f32.mrb[0].mxu0
        %v480 = vadd.f32 0.0, %v479
        %v481 = vpop.f32.mrb[0].mxu0
        %v482 = vpop.f32.mrb[0].mxu0
        %v483 = vadd.f32 0.0, %v482
        %v484 = vpop.f32.mrb[0].mxu0
        %485 = vdwg.mxu0
        %v486 = vld [vmem:[%s5] sm:$0x1]
        %v487 = vld [vmem:[%s5 + $0x2] sm:$0x1]
        %v488 = vadd.f32 %v480, %v483
        %v489 = vrot.slane %v488, 4
        %v490 = vadd.f32 %v488, %v489
        %v491 = vrot.slane %v490, 2
        %v492 = vadd.f32 %v490, %v491
        %v493 = vrot.slane %v492, 1
        %v494 = vadd.f32 %v492, %v493
        %v495 = vmul.f32 %v480, %v480
        %v496 = vmul.f32 %v483, %v483
        %v497 = vadd.f32 %v495, %v496
        %v498 = vrot.slane %v497, 4
        %v499 = vadd.f32 %v497, %v498
        %v500 = vrot.slane %v499, 2
        %v501 = vadd.f32 %v499, %v500
        %v502 = vrot.slane %v501, 1
        %v503 = vadd.f32 %v501, %v502
        %v504 = vmul.f32 %v494, 0.0625
        %v505 = vmul.f32 %v503, 0.0625
        %v506 = vmul.f32 %v504, %v504
        %v507 = vsub.f32 %v505, %v506
        %v508 = vmax.f32 %v507, 0.0
        %v509 = vadd.f32 %v508, 1e-05
        %v510 = vrsqrt.pop %v509
        %v511 = vmul.f32 %v510, %v486
        %v512 = vmul.f32 %v504, %v511
        %v513 = vsub.f32 %v487, %v512
        %v514 = vlaneseq
        %v515 = vshrl.u32 %v514, 7
        %v516 = vsub.s32 0, %v515
        %v517 = vrot.slane %v511, %v516
        %v518 = vmul.f32 %v480, %v517
        %v519 = vmul.f32 %v483, %v517
        %v520 = vlaneseq
        %v521 = vshrl.u32 %v520, 7
        %v522 = vsub.s32 0, %v521
        %v523 = vrot.slane %v513, %v522
        %v524 = vadd.f32 %v518, %v523
        %v525 = vadd.f32 %v519, %v523
        %v526 = vmax.f32 %v524, 0.0
        %v527 = vmax.f32 %v525, 0.0
        %v528 = vpack.c.bf16 %v527, %v526
        %s529 = scalar_lea.vmem [#allocation11], 128
        %v530 = vld [vmem:[%s529] sm:$0xf]
        %v531 = vld [vmem:[%s529 + $0x4] sm:$0xf]
        %v532 = vld [vmem:[%s529 + $0x8] sm:$0xf]
        %v533 = vld [vmem:[%s529 + $0xc] sm:$0xf]
        %v534 = vld [vmem:[%s529 + $0x10] sm:$0xf]
        %v535 = vld [vmem:[%s529 + $0x14] sm:$0xf]
        %v536 = vld [vmem:[%s529 + $0x18] sm:$0xf]
        %v537 = vld [vmem:[%s529 + $0x1c] sm:$0xf]
        %v538 = vld [vmem:[%s529 + $0x20] sm:$0xf]
        %v539 = vld [vmem:[%s529 + $0x24] sm:$0xf]
        %v540 = vld [vmem:[%s529 + $0x28] sm:$0xf]
        %v541 = vld [vmem:[%s529 + $0x2c] sm:$0xf]
        %v542 = vld [vmem:[%s529 + $0x30] sm:$0xf]
        %v543 = vld [vmem:[%s529 + $0x34] sm:$0xf]
        %v544 = vld [vmem:[%s529 + $0x38] sm:$0xf]
        %v545 = vld [vmem:[%s529 + $0x3c] sm:$0xf]
        %v562 = vunpack.c.l.b16 %v530
        %v563 = vunpack.c.l.b16 %v531
        %v564 = vunpack.c.l.b16 %v532
        %v565 = vunpack.c.l.b16 %v533
        %v566 = vunpack.c.l.b16 %v534
        %v567 = vunpack.c.l.b16 %v535
        %v568 = vunpack.c.l.b16 %v536
        %v569 = vunpack.c.l.b16 %v537
        %v570 = vunpack.c.l.b16 %v538
        %v571 = vunpack.c.l.b16 %v539
        %v572 = vunpack.c.l.b16 %v540
        %v573 = vunpack.c.l.b16 %v541
        %v574 = vunpack.c.l.b16 %v542
        %v575 = vunpack.c.l.b16 %v543
        %v576 = vunpack.c.l.b16 %v544
        %v577 = vunpack.c.l.b16 %v545
        %v578 = vpack.c.b16 %v563, %v562
        %v579 = vpack.c.b16 %v565, %v564
        %v580 = vpack.c.b16 %v567, %v566
        %v581 = vpack.c.b16 %v569, %v568
        %v582 = vpack.c.b16 %v571, %v570
        %v583 = vpack.c.b16 %v573, %v572
        %v584 = vpack.c.b16 %v575, %v574
        %v585 = vpack.c.b16 %v577, %v576
        %594 = vmatprep.subr.bf16.mxu0 0
        %595 = vmatpush1.bf16.msra.mxu0 %v578
        %596 = vmatprep.subr.bf16.mxu0 0
        %597 = vmatpush1.bf16.msra.mxu0 %v579
        %598 = vmatprep.subr.bf16.mxu0 0
        %599 = vmatpush1.bf16.msra.mxu0 %v580
        %600 = vmatprep.subr.bf16.mxu0 0
        %601 = vmatpush1.bf16.msra.mxu0 %v581
        %602 = vmatprep.subr.bf16.mxu0 0
        %603 = vmatpush1.bf16.msra.mxu0 %v582
        %604 = vmatprep.subr.bf16.mxu0 0
        %605 = vmatpush1.bf16.msra.mxu0 %v583
        %606 = vmatprep.subr.bf16.mxu0 0
        %607 = vmatpush1.bf16.msra.mxu0 %v584
        %608 = vmatprep.subr.bf16.mxu0 0
        %609 = vmatpush1.bf16.msra.mxu0 %v585
        %610 = vmatprep.subr.bf16.mxu0 0
        %611 = vmatpush1.bf16.msra.mxu0 0
        %612 = vmatprep.subr.bf16.mxu0 0
        %613 = vmatpush1.bf16.msra.mxu0 0
        %614 = vmatprep.subr.bf16.mxu0 0
        %615 = vmatpush1.bf16.msra.mxu0 0
        %616 = vmatprep.subr.bf16.mxu0 0
        %617 = vmatpush1.bf16.msra.mxu0 0
        %618 = vmatprep.subr.bf16.mxu0 0
        %619 = vmatpush1.bf16.msra.mxu0 0
        %620 = vmatprep.subr.bf16.mxu0 0
        %621 = vmatpush1.bf16.msra.mxu0 0
        %622 = vmatprep.subr.bf16.mxu0 0
        %623 = vmatpush1.bf16.msra.mxu0 0
        %624 = vmatprep.subr.bf16.mxu0 0
        %625 = vmatpush1.bf16.msra.mxu0 0
        %626 = vmatprep.mubr.bf16.mxu0 0
        %627 = vmatmul.mubr.bf16.gmra.mrb[0].mxu0 %v528
        %v628 = vpop.f32.mrb[0].mxu0
        %v629 = vadd.f32 0.0, %v628
        %v630 = vpop.f32.mrb[0].mxu0
        %v631 = vpop.f32.mrb[0].mxu0
        %v632 = vadd.f32 0.0, %v631
        %v633 = vpop.f32.mrb[0].mxu0
        %634 = vdwg.mxu0
        %v635 = vld [vmem:[%s5 + $0x4] sm:$0x1]
        %v636 = vld [vmem:[%s5 + $0x6] sm:$0x1]
        %v637 = vadd.f32 %v629, %v632
        %v638 = vrot.slane %v637, 4
        %v639 = vadd.f32 %v637, %v638
        %v640 = vrot.slane %v639, 2
        %v641 = vadd.f32 %v639, %v640
        %v642 = vrot.slane %v641, 1
        %v643 = vadd.f32 %v641, %v642
        %v644 = vmul.f32 %v629, %v629
        %v645 = vmul.f32 %v632, %v632
        %v646 = vadd.f32 %v644, %v645
        %v647 = vrot.slane %v646, 4
        %v648 = vadd.f32 %v646, %v647
        %v649 = vrot.slane %v648, 2
        %v650 = vadd.f32 %v648, %v649
        %v651 = vrot.slane %v650, 1
        %v652 = vadd.f32 %v650, %v651
        %v653 = vmul.f32 %v643, 0.0625
        %v654 = vmul.f32 %v652, 0.0625
        %v655 = vmul.f32 %v653, %v653
        %v656 = vsub.f32 %v654, %v655
        %v657 = vmax.f32 %v656, 0.0
        %v658 = vadd.f32 %v657, 1e-05
        %v659 = vrsqrt.pop %v658
        %v660 = vmul.f32 %v659, %v635
        %v661 = vmul.f32 %v653, %v660
        %v662 = vsub.f32 %v636, %v661
        %v663 = vlaneseq
        %v664 = vshrl.u32 %v663, 7
        %v665 = vsub.s32 0, %v664
        %v666 = vrot.slane %v660, %v665
        %v667 = vmul.f32 %v629, %v666
        %v668 = vmul.f32 %v632, %v666
        %v669 = vlaneseq
        %v670 = vshrl.u32 %v669, 7
        %v671 = vsub.s32 0, %v670
        %v672 = vrot.slane %v662, %v671
        %v673 = vadd.f32 %v667, %v672
        %v674 = vadd.f32 %v668, %v672
        %v675 = vmax.f32 %v673, 0.0
        %v676 = vmax.f32 %v674, 0.0
        %v677 = vadd.f32 %v322, %v675
        %v678 = vadd.f32 %v323, %v676
        %v679 = vpack.c.bf16 %v676, %v675
        %680 = vmatprep.subr.bf16.mxu0 0
        %681 = vmatpush1.bf16.msra.mxu0 %v679
        %682 = vmatprep.subr.bf16.mxu0 0
        %683 = vmatpush1.bf16.msra.mxu0 0
        %684 = vmatprep.subr.bf16.mxu0 0
        %685 = vmatpush1.bf16.msra.mxu0 0
        %686 = vmatprep.subr.bf16.mxu0 0
        %687 = vmatpush1.bf16.msra.mxu0 0
        %688 = vmatprep.subr.bf16.mxu0 0
        %689 = vmatpush1.bf16.msra.mxu0 0
        %690 = vmatprep.subr.bf16.mxu0 0
        %691 = vmatpush1.bf16.msra.mxu0 0
        %692 = vmatprep.subr.bf16.mxu0 0
        %693 = vmatpush1.bf16.msra.mxu0 0
        %694 = vmatprep.subr.bf16.mxu0 0
        %695 = vmatpush1.bf16.msra.mxu0 0
        %696 = vmatprep.subr.bf16.mxu0 0
        %697 = vmatpush1.bf16.msra.mxu0 0
        %698 = vmatprep.subr.bf16.mxu0 0
        %699 = vmatpush1.bf16.msra.mxu0 0
        %700 = vmatprep.subr.bf16.mxu0 0
        %701 = vmatpush1.bf16.msra.mxu0 0
        %702 = vmatprep.subr.bf16.mxu0 0
        %703 = vmatpush1.bf16.msra.mxu0 0
        %704 = vmatprep.subr.bf16.mxu0 0
        %705 = vmatpush1.bf16.msra.mxu0 0
        %706 = vmatprep.subr.bf16.mxu0 0
        %707 = vmatpush1.bf16.msra.mxu0 0
        %708 = vmatprep.subr.bf16.mxu0 0
        %709 = vmatpush1.bf16.msra.mxu0 0
        %710 = vmatprep.subr.bf16.mxu0 0
        %711 = vmatpush1.bf16.msra.mxu0 0
        %712 = vmatprep.mubr.bf16.mxu0 0
        %713 = vmatmul.mubr.bf16.gmra.mrb[0].mxu0 %v337
        %v714 = vpop.f32.mrb[0].mxu0
        %v715 = vadd.f32 0.0, %v714
        %v716 = vpop.f32.mrb[0].mxu0
        %v717 = vpop.f32.mrb[0].mxu0
        %v718 = vadd.f32 0.0, %v717
        %v719 = vpop.f32.mrb[0].mxu0
        %720 = vdwg.mxu0
        %v721 = vpack.c.bf16 %v718, %v715
        %s722 = scalar_lea.vmem [#allocation11], 64
        %v723 = vld [vmem:[%s722] sm:$0xf]
        %v724 = vld [vmem:[%s722 + $0x4] sm:$0xf]
        %v725 = vld [vmem:[%s722 + $0x8] sm:$0xf]
        %v726 = vld [vmem:[%s722 + $0xc] sm:$0xf]
        %v727 = vld [vmem:[%s722 + $0x10] sm:$0xf]
        %v728 = vld [vmem:[%s722 + $0x14] sm:$0xf]
        %v729 = vld [vmem:[%s722 + $0x18] sm:$0xf]
        %v730 = vld [vmem:[%s722 + $0x1c] sm:$0xf]
        %v731 = vld [vmem:[%s722 + $0x20] sm:$0xf]
        %v732 = vld [vmem:[%s722 + $0x24] sm:$0xf]
        %v733 = vld [vmem:[%s722 + $0x28] sm:$0xf]
        %v734 = vld [vmem:[%s722 + $0x2c] sm:$0xf]
        %v735 = vld [vmem:[%s722 + $0x30] sm:$0xf]
        %v736 = vld [vmem:[%s722 + $0x34] sm:$0xf]
        %v737 = vld [vmem:[%s722 + $0x38] sm:$0xf]
        %v738 = vld [vmem:[%s722 + $0x3c] sm:$0xf]
        %v755 = vunpack.c.l.b16 %v723
        %v756 = vunpack.c.l.b16 %v724
        %v757 = vunpack.c.l.b16 %v725
        %v758 = vunpack.c.l.b16 %v726
        %v759 = vunpack.c.l.b16 %v727
        %v760 = vunpack.c.l.b16 %v728
        %v761 = vunpack.c.l.b16 %v729
        %v762 = vunpack.c.l.b16 %v730
        %v763 = vunpack.c.l.b16 %v731
        %v764 = vunpack.c.l.b16 %v732
        %v765 = vunpack.c.l.b16 %v733
        %v766 = vunpack.c.l.b16 %v734
        %v767 = vunpack.c.l.b16 %v735
        %v768 = vunpack.c.l.b16 %v736
        %v769 = vunpack.c.l.b16 %v737
        %v770 = vunpack.c.l.b16 %v738
        %v771 = vpack.c.b16 %v756, %v755
        %v772 = vpack.c.b16 %v758, %v757
        %v773 = vpack.c.b16 %v760, %v759
        %v774 = vpack.c.b16 %v762, %v761
        %v775 = vpack.c.b16 %v764, %v763
        %v776 = vpack.c.b16 %v766, %v765
        %v777 = vpack.c.b16 %v768, %v767
        %v778 = vpack.c.b16 %v770, %v769
        %787 = vmatprep.subr.bf16.mxu0 0
        %788 = vmatpush1.bf16.msra.mxu0 %v771
        %789 = vmatprep.subr.bf16.mxu0 0
        %790 = vmatpush1.bf16.msra.mxu0 %v772
        %791 = vmatprep.subr.bf16.mxu0 0
        %792 = vmatpush1.bf16.msra.mxu0 %v773
        %793 = vmatprep.subr.bf16.mxu0 0
        %794 = vmatpush1.bf16.msra.mxu0 %v774
        %795 = vmatprep.subr.bf16.mxu0 0
        %796 = vmatpush1.bf16.msra.mxu0 %v775
        %797 = vmatprep.subr.bf16.mxu0 0
        %798 = vmatpush1.bf16.msra.mxu0 %v776
        %799 = vmatprep.subr.bf16.mxu0 0
        %800 = vmatpush1.bf16.msra.mxu0 %v777
        %801 = vmatprep.subr.bf16.mxu0 0
        %802 = vmatpush1.bf16.msra.mxu0 %v778
        %803 = vmatprep.subr.bf16.mxu0 0
        %804 = vmatpush1.bf16.msra.mxu0 0
        %805 = vmatprep.subr.bf16.mxu0 0
        %806 = vmatpush1.bf16.msra.mxu0 0
        %807 = vmatprep.subr.bf16.mxu0 0
        %808 = vmatpush1.bf16.msra.mxu0 0
        %809 = vmatprep.subr.bf16.mxu0 0
        %810 = vmatpush1.bf16.msra.mxu0 0
        %811 = vmatprep.subr.bf16.mxu0 0
        %812 = vmatpush1.bf16.msra.mxu0 0
        %813 = vmatprep.subr.bf16.mxu0 0
        %814 = vmatpush1.bf16.msra.mxu0 0
        %815 = vmatprep.subr.bf16.mxu0 0
        %816 = vmatpush1.bf16.msra.mxu0 0
        %817 = vmatprep.subr.bf16.mxu0 0
        %818 = vmatpush1.bf16.msra.mxu0 0
        %819 = vmatprep.mubr.bf16.mxu0 0
        %820 = vmatmul.mubr.bf16.gmra.mrb[0].mxu0 %v721
        %v821 = vpop.f32.mrb[0].mxu0
        %v822 = vadd.f32 0.0, %v821
        %v823 = vpop.f32.mrb[0].mxu0
        %v824 = vpop.f32.mrb[0].mxu0
        %v825 = vadd.f32 0.0, %v824
        %v826 = vpop.f32.mrb[0].mxu0
        %827 = vdwg.mxu0
        %v828 = vld [vmem:[%s5 + $0x1] sm:$0x1]
        %v829 = vld [vmem:[%s5 + $0x3] sm:$0x1]
        %v830 = vadd.f32 %v822, %v825
        %v831 = vrot.slane %v830, 4
        %v832 = vadd.f32 %v830, %v831
        %v833 = vrot.slane %v832, 2
        %v834 = vadd.f32 %v832, %v833
        %v835 = vrot.slane %v834, 1
        %v836 = vadd.f32 %v834, %v835
        %v837 = vmul.f32 %v822, %v822
        %v838 = vmul.f32 %v825, %v825
        %v839 = vadd.f32 %v837, %v838
        %v840 = vrot.slane %v839, 4
        %v841 = vadd.f32 %v839, %v840
        %v842 = vrot.slane %v841, 2
        %v843 = vadd.f32 %v841, %v842
        %v844 = vrot.slane %v843, 1
        %v845 = vadd.f32 %v843, %v844
        %v846 = vmul.f32 %v836, 0.0625
        %v847 = vmul.f32 %v845, 0.0625
        %v848 = vmul.f32 %v846, %v846
        %v849 = vsub.f32 %v847, %v848
        %v850 = vmax.f32 %v849, 0.0
        %v851 = vadd.f32 %v850, 1e-05
        %v852 = vrsqrt.pop %v851
        %v853 = vmul.f32 %v852, %v828
        %v854 = vmul.f32 %v846, %v853
        %v855 = vsub.f32 %v829, %v854
        %v856 = vlaneseq
        %v857 = vshrl.u32 %v856, 7
        %v858 = vsub.s32 0, %v857
        %v859 = vrot.slane %v853, %v858
        %v860 = vmul.f32 %v822, %v859
        %v861 = vmul.f32 %v825, %v859
        %v862 = vlaneseq
        %v863 = vshrl.u32 %v862, 7
        %v864 = vsub.s32 0, %v863
        %v865 = vrot.slane %v855, %v864
        %v866 = vadd.f32 %v860, %v865
        %v867 = vadd.f32 %v861, %v865
        %v868 = vmax.f32 %v866, 0.0
        %v869 = vmax.f32 %v867, 0.0
        %v870 = vpack.c.bf16 %v869, %v868
        %s871 = scalar_lea.vmem [#allocation11], 192
        %v872 = vld [vmem:[%s871] sm:$0xf]
        %v873 = vld [vmem:[%s871 + $0x4] sm:$0xf]
        %v874 = vld [vmem:[%s871 + $0x8] sm:$0xf]
        %v875 = vld [vmem:[%s871 + $0xc] sm:$0xf]
        %v876 = vld [vmem:[%s871 + $0x10] sm:$0xf]
        %v877 = vld [vmem:[%s871 + $0x14] sm:$0xf]
        %v878 = vld [vmem:[%s871 + $0x18] sm:$0xf]
        %v879 = vld [vmem:[%s871 + $0x1c] sm:$0xf]
        %v880 = vld [vmem:[%s871 + $0x20] sm:$0xf]
        %v881 = vld [vmem:[%s871 + $0x24] sm:$0xf]
        %v882 = vld [vmem:[%s871 + $0x28] sm:$0xf]
        %v883 = vld [vmem:[%s871 + $0x2c] sm:$0xf]
        %v884 = vld [vmem:[%s871 + $0x30] sm:$0xf]
        %v885 = vld [vmem:[%s871 + $0x34] sm:$0xf]
        %v886 = vld [vmem:[%s871 + $0x38] sm:$0xf]
        %v887 = vld [vmem:[%s871 + $0x3c] sm:$0xf]
        %v904 = vunpack.c.l.b16 %v872
        %v905 = vunpack.c.l.b16 %v873
        %v906 = vunpack.c.l.b16 %v874
        %v907 = vunpack.c.l.b16 %v875
        %v908 = vunpack.c.l.b16 %v876
        %v909 = vunpack.c.l.b16 %v877
        %v910 = vunpack.c.l.b16 %v878
        %v911 = vunpack.c.l.b16 %v879
        %v912 = vunpack.c.l.b16 %v880
        %v913 = vunpack.c.l.b16 %v881
        %v914 = vunpack.c.l.b16 %v882
        %v915 = vunpack.c.l.b16 %v883
        %v916 = vunpack.c.l.b16 %v884
        %v917 = vunpack.c.l.b16 %v885
        %v918 = vunpack.c.l.b16 %v886
        %v919 = vunpack.c.l.b16 %v887
        %v920 = vpack.c.b16 %v905, %v904
        %v921 = vpack.c.b16 %v907, %v906
        %v922 = vpack.c.b16 %v909, %v908
        %v923 = vpack.c.b16 %v911, %v910
        %v924 = vpack.c.b16 %v913, %v912
        %v925 = vpack.c.b16 %v915, %v914
        %v926 = vpack.c.b16 %v917, %v916
        %v927 = vpack.c.b16 %v919, %v918
        %936 = vmatprep.subr.bf16.mxu0 0
        %937 = vmatpush1.bf16.msra.mxu0 %v920
        %938 = vmatprep.subr.bf16.mxu0 0
        %939 = vmatpush1.bf16.msra.mxu0 %v921
        %940 = vmatprep.subr.bf16.mxu0 0
        %941 = vmatpush1.bf16.msra.mxu0 %v922
        %942 = vmatprep.subr.bf16.mxu0 0
        %943 = vmatpush1.bf16.msra.mxu0 %v923
        %944 = vmatprep.subr.bf16.mxu0 0
        %945 = vmatpush1.bf16.msra.mxu0 %v924
        %946 = vmatprep.subr.bf16.mxu0 0
        %947 = vmatpush1.bf16.msra.mxu0 %v925
        %948 = vmatprep.subr.bf16.mxu0 0
        %949 = vmatpush1.bf16.msra.mxu0 %v926
        %950 = vmatprep.subr.bf16.mxu0 0
        %951 = vmatpush1.bf16.msra.mxu0 %v927
        %952 = vmatprep.subr.bf16.mxu0 0
        %953 = vmatpush1.bf16.msra.mxu0 0
        %954 = vmatprep.subr.bf16.mxu0 0
        %955 = vmatpush1.bf16.msra.mxu0 0
        %956 = vmatprep.subr.bf16.mxu0 0
        %957 = vmatpush1.bf16.msra.mxu0 0
        %958 = vmatprep.subr.bf16.mxu0 0
        %959 = vmatpush1.bf16.msra.mxu0 0
        %960 = vmatprep.subr.bf16.mxu0 0
        %961 = vmatpush1.bf16.msra.mxu0 0
        %962 = vmatprep.subr.bf16.mxu0 0
        %963 = vmatpush1.bf16.msra.mxu0 0
        %964 = vmatprep.subr.bf16.mxu0 0
        %965 = vmatpush1.bf16.msra.mxu0 0
        %966 = vmatprep.subr.bf16.mxu0 0
        %967 = vmatpush1.bf16.msra.mxu0 0
        %968 = vmatprep.mubr.bf16.mxu0 0
        %969 = vmatmul.mubr.bf16.gmra.mrb[0].mxu0 %v870
        %v970 = vpop.f32.mrb[0].mxu0
        %v971 = vadd.f32 0.0, %v970
        %v972 = vpop.f32.mrb[0].mxu0
        %v973 = vpop.f32.mrb[0].mxu0
        %v974 = vadd.f32 0.0, %v973
        %v975 = vpop.f32.mrb[0].mxu0
        %976 = vdwg.mxu0
        %v977 = vld [vmem:[%s5 + $0x5] sm:$0x1]
        %v978 = vld [vmem:[%s5 + $0x7] sm:$0x1]
        %v979 = vadd.f32 %v971, %v974
        %v980 = vrot.slane %v979, 4
        %v981 = vadd.f32 %v979, %v980
        %v982 = vrot.slane %v981, 2
        %v983 = vadd.f32 %v981, %v982
        %v984 = vrot.slane %v983, 1
        %v985 = vadd.f32 %v983, %v984
        %v986 = vmul.f32 %v971, %v971
        %v987 = vmul.f32 %v974, %v974
        %v988 = vadd.f32 %v986, %v987
        %v989 = vrot.slane %v988, 4
        %v990 = vadd.f32 %v988, %v989
        %v991 = vrot.slane %v990, 2
        %v992 = vadd.f32 %v990, %v991
        %v993 = vrot.slane %v992, 1
        %v994 = vadd.f32 %v992, %v993
        %v995 = vmul.f32 %v985, 0.0625
        %v996 = vmul.f32 %v994, 0.0625
        %v997 = vmul.f32 %v995, %v995
        %v998 = vsub.f32 %v996, %v997
        %v999 = vmax.f32 %v998, 0.0
        %v1000 = vadd.f32 %v999, 1e-05
        %v1001 = vrsqrt.pop %v1000
        %v1002 = vmul.f32 %v1001, %v977
        %v1003 = vmul.f32 %v995, %v1002
        %v1004 = vsub.f32 %v978, %v1003
        %v1005 = vlaneseq
        %v1006 = vshrl.u32 %v1005, 7
        %v1007 = vsub.s32 0, %v1006
        %v1008 = vrot.slane %v1002, %v1007
        %v1009 = vmul.f32 %v971, %v1008
        %v1010 = vmul.f32 %v974, %v1008
        %v1011 = vlaneseq
        %v1012 = vshrl.u32 %v1011, 7
        %v1013 = vsub.s32 0, %v1012
        %v1014 = vrot.slane %v1004, %v1013
        %v1015 = vadd.f32 %v1009, %v1014
        %v1016 = vadd.f32 %v1010, %v1014
        %v1017 = vmax.f32 %v1015, 0.0
        %v1018 = vmax.f32 %v1016, 0.0
        %v1019 = vadd.f32 %v677, %v1017
        %v1020 = vadd.f32 %v678, %v1018
        %1021 = vst [vmem:[#allocation2] sm:$0xff] %v1019
        %1022 = vst [vmem:[#allocation2 + $0x8] sm:$0xff] %v1020
        %s1023 = smul.u32 %s31, 16
        %s1024 = sld [smem:[#allocation5 + %s1023]]
        %s1025 = sadd.s32 %s1023, 8
        %s1026 = sld [smem:[#allocation5 + %s1025]]
        %s1027 = scalar_lea.vmem [#allocation2], %s1024
        %v1028 = vld [vmem:[%s1027] sm:$0x1]
        %s1029 = scalar_lea.vmem [#allocation2], %s1026
        %v1030 = vld [vmem:[%s1029] sm:$0x1]
        %s1031 = sadd.s32 %s1023, 1
        %s1032 = sld [smem:[#allocation5 + %s1031]]
        %s1033 = sadd.s32 %s1023, 9
        %s1034 = sld [smem:[#allocation5 + %s1033]]
        %s1035 = scalar_lea.vmem [#allocation2], %s1032
        %v1036 = vld [vmem:[%s1035] sm:$0x1]
        %s1037 = scalar_lea.vmem [#allocation2], %s1034
        %v1038 = vld [vmem:[%s1037] sm:$0x1]
        %s1039 = sadd.s32 %s1023, 2
        %s1040 = sld [smem:[#allocation5 + %s1039]]
        %s1041 = sadd.s32 %s1023, 10
        %s1042 = sld [smem:[#allocation5 + %s1041]]
        %s1043 = scalar_lea.vmem [#allocation2], %s1040
        %v1044 = vld [vmem:[%s1043] sm:$0x1]
        %s1045 = scalar_lea.vmem [#allocation2], %s1042
        %v1046 = vld [vmem:[%s1045] sm:$0x1]
        %s1047 = sadd.s32 %s1023, 3
        %s1048 = sld [smem:[#allocation5 + %s1047]]
        %s1049 = sadd.s32 %s1023, 11
        %s1050 = sld [smem:[#allocation5 + %s1049]]
        %s1051 = scalar_lea.vmem [#allocation2], %s1048
        %v1052 = vld [vmem:[%s1051] sm:$0x1]
        %s1053 = scalar_lea.vmem [#allocation2], %s1050
        %v1054 = vld [vmem:[%s1053] sm:$0x1]
        %s1055 = sadd.s32 %s1023, 4
        %s1056 = sld [smem:[#allocation5 + %s1055]]
        %s1057 = sadd.s32 %s1023, 12
        %s1058 = sld [smem:[#allocation5 + %s1057]]
        %s1059 = scalar_lea.vmem [#allocation2], %s1056
        %v1060 = vld [vmem:[%s1059] sm:$0x1]
        %s1061 = scalar_lea.vmem [#allocation2], %s1058
        %v1062 = vld [vmem:[%s1061] sm:$0x1]
        %s1063 = sadd.s32 %s1023, 5
        %s1064 = sld [smem:[#allocation5 + %s1063]]
        %s1065 = sadd.s32 %s1023, 13
        %s1066 = sld [smem:[#allocation5 + %s1065]]
        %s1067 = scalar_lea.vmem [#allocation2], %s1064
        %v1068 = vld [vmem:[%s1067] sm:$0x1]
        %s1069 = scalar_lea.vmem [#allocation2], %s1066
        %v1070 = vld [vmem:[%s1069] sm:$0x1]
        %s1071 = sadd.s32 %s1023, 6
        %s1072 = sld [smem:[#allocation5 + %s1071]]
        %s1073 = sadd.s32 %s1023, 14
        %s1074 = sld [smem:[#allocation5 + %s1073]]
        %s1075 = scalar_lea.vmem [#allocation2], %s1072
        %v1076 = vld [vmem:[%s1075] sm:$0x1]
        %s1077 = scalar_lea.vmem [#allocation2], %s1074
        %v1078 = vld [vmem:[%s1077] sm:$0x1]
        %s1079 = sadd.s32 %s1023, 7
        %s1080 = sld [smem:[#allocation5 + %s1079]]
        %s1081 = sadd.s32 %s1023, 15
        %s1082 = sld [smem:[#allocation5 + %s1081]]
        %s1083 = scalar_lea.vmem [#allocation2], %s1080
        %v1084 = vld [vmem:[%s1083] sm:$0x1]
        %s1085 = scalar_lea.vmem [#allocation2], %s1082
        %v1086 = vld [vmem:[%s1085] sm:$0x1]
        %v1089 = vrot.slane %v1036, 7
        %v1090 = vrot.slane %v1038, 7
        %v1095 = vrot.slane %v1044, 6
        %v1096 = vrot.slane %v1046, 6
        %v1101 = vrot.slane %v1052, 5
        %v1102 = vrot.slane %v1054, 5
        %v1107 = vrot.slane %v1060, 4
        %v1108 = vrot.slane %v1062, 4
        %v1113 = vrot.slane %v1068, 3
        %v1114 = vrot.slane %v1070, 3
        %v1119 = vrot.slane %v1076, 2
        %v1120 = vrot.slane %v1078, 2
        %v1125 = vrot.slane %v1084, 1
        %v1126 = vrot.slane %v1086, 1
        %vm1129 = vcmask 1040384
        %v1130 = vsel %vm1129, %v1028, %v1089
        %v1131 = vsel %vm1129, %v1030, %v1090
        %vm1132 = vcmask 1041408
        %v1133 = vsel %vm1132, %v1130, %v1095
        %v1134 = vsel %vm1132, %v1131, %v1096
        %vm1135 = vcmask 1042432
        %v1136 = vsel %vm1135, %v1133, %v1101
        %v1137 = vsel %vm1135, %v1134, %v1102
        %vm1138 = vcmask 1043456
        %v1139 = vsel %vm1138, %v1136, %v1107
        %v1140 = vsel %vm1138, %v1137, %v1108
        %vm1141 = vcmask 1044480
        %v1142 = vsel %vm1141, %v1139, %v1113
        %v1143 = vsel %vm1141, %v1140, %v1114
        %vm1144 = vcmask 1045504
        %v1145 = vsel %vm1144, %v1142, %v1119
        %v1146 = vsel %vm1144, %v1143, %v1120
        %vm1147 = vcmask 1046528
        %v1148 = vsel %vm1147, %v1145, %v1125
        %v1149 = vsel %vm1147, %v1146, %v1126
        %1150 = vst [vmem:[#allocation3] sm:$0xff] %v1148
        %1151 = vst [vmem:[#allocation3 + $0x8] sm:$0xff] %v1149
        %v1152 = vld [vmem:[#allocation3] sm:$0xff]
        %v1153 = vld [vmem:[#allocation3 + $0x8] sm:$0xff]
        %v1154 = vpack.c.bf16 %v1152, %v1152
        %v1155 = vpack.c.bf16 %v1153, %v1153
        %v1156 = vld [vmem:[#allocation12] sm:$0xf]
        %v1157 = vld [vmem:[#allocation12 + $0x4] sm:$0xf]
        %v1158 = vld [vmem:[#allocation12 + $0x8] sm:$0xf]
        %v1159 = vld [vmem:[#allocation12 + $0xc] sm:$0xf]
        %v1160 = vld [vmem:[#allocation12 + $0x10] sm:$0xf]
        %v1161 = vld [vmem:[#allocation12 + $0x14] sm:$0xf]
        %v1162 = vld [vmem:[#allocation12 + $0x18] sm:$0xf]
        %v1163 = vld [vmem:[#allocation12 + $0x1c] sm:$0xf]
        %v1164 = vld [vmem:[#allocation12 + $0x20] sm:$0xf]
        %v1165 = vld [vmem:[#allocation12 + $0x24] sm:$0xf]
        %v1166 = vld [vmem:[#allocation12 + $0x28] sm:$0xf]
        %v1167 = vld [vmem:[#allocation12 + $0x2c] sm:$0xf]
        %v1168 = vld [vmem:[#allocation12 + $0x30] sm:$0xf]
        %v1169 = vld [vmem:[#allocation12 + $0x34] sm:$0xf]
        %v1170 = vld [vmem:[#allocation12 + $0x38] sm:$0xf]
        %v1171 = vld [vmem:[#allocation12 + $0x3c] sm:$0xf]
        %v1172 = vld [vmem:[#allocation12 + $0x40] sm:$0xf]
        %v1173 = vld [vmem:[#allocation12 + $0x44] sm:$0xf]
        %v1174 = vld [vmem:[#allocation12 + $0x48] sm:$0xf]
        %v1175 = vld [vmem:[#allocation12 + $0x4c] sm:$0xf]
        %v1176 = vld [vmem:[#allocation12 + $0x50] sm:$0xf]
        %v1177 = vld [vmem:[#allocation12 + $0x54] sm:$0xf]
        %v1178 = vld [vmem:[#allocation12 + $0x58] sm:$0xf]
        %v1179 = vld [vmem:[#allocation12 + $0x5c] sm:$0xf]
        %v1180 = vld [vmem:[#allocation12 + $0x60] sm:$0xf]
        %v1181 = vld [vmem:[#allocation12 + $0x64] sm:$0xf]
        %v1182 = vld [vmem:[#allocation12 + $0x68] sm:$0xf]
        %v1183 = vld [vmem:[#allocation12 + $0x6c] sm:$0xf]
        %v1184 = vld [vmem:[#allocation12 + $0x70] sm:$0xf]
        %v1185 = vld [vmem:[#allocation12 + $0x74] sm:$0xf]
        %v1186 = vld [vmem:[#allocation12 + $0x78] sm:$0xf]
        %v1187 = vld [vmem:[#allocation12 + $0x7c] sm:$0xf]
        %v1188 = vld [vmem:[%s5 + $0x8] sm:$0x1]
        %v1189 = vlaneseq
        %v1190 = vshrl.u32 %v1189, 7
        %v1191 = vsub.s32 0, %v1190
        %v1192 = vrot.slane %v1188, %v1191
        %v1225 = vunpack.c.l.b16 %v1156
        %v1226 = vunpack.c.l.b16 %v1157
        %v1227 = vunpack.c.l.b16 %v1158
        %v1228 = vunpack.c.l.b16 %v1159
        %v1229 = vunpack.c.l.b16 %v1160
        %v1230 = vunpack.c.l.b16 %v1161
        %v1231 = vunpack.c.l.b16 %v1162
        %v1232 = vunpack.c.l.b16 %v1163
        %v1233 = vunpack.c.l.b16 %v1164
        %v1234 = vunpack.c.l.b16 %v1165
        %v1235 = vunpack.c.l.b16 %v1166
        %v1236 = vunpack.c.l.b16 %v1167
        %v1237 = vunpack.c.l.b16 %v1168
        %v1238 = vunpack.c.l.b16 %v1169
        %v1239 = vunpack.c.l.b16 %v1170
        %v1240 = vunpack.c.l.b16 %v1171
        %v1241 = vunpack.c.l.b16 %v1172
        %v1242 = vunpack.c.l.b16 %v1173
        %v1243 = vunpack.c.l.b16 %v1174
        %v1244 = vunpack.c.l.b16 %v1175
        %v1245 = vunpack.c.l.b16 %v1176
        %v1246 = vunpack.c.l.b16 %v1177
        %v1247 = vunpack.c.l.b16 %v1178
        %v1248 = vunpack.c.l.b16 %v1179
        %v1249 = vunpack.c.l.b16 %v1180
        %v1250 = vunpack.c.l.b16 %v1181
        %v1251 = vunpack.c.l.b16 %v1182
        %v1252 = vunpack.c.l.b16 %v1183
        %v1253 = vunpack.c.l.b16 %v1184
        %v1254 = vunpack.c.l.b16 %v1185
        %v1255 = vunpack.c.l.b16 %v1186
        %v1256 = vunpack.c.l.b16 %v1187
        %v1257 = vpack.c.b16 %v1226, %v1225
        %v1258 = vpack.c.b16 %v1228, %v1227
        %v1259 = vpack.c.b16 %v1230, %v1229
        %v1260 = vpack.c.b16 %v1232, %v1231
        %v1261 = vpack.c.b16 %v1234, %v1233
        %v1262 = vpack.c.b16 %v1236, %v1235
        %v1263 = vpack.c.b16 %v1238, %v1237
        %v1264 = vpack.c.b16 %v1240, %v1239
        %v1265 = vpack.c.b16 %v1242, %v1241
        %v1266 = vpack.c.b16 %v1244, %v1243
        %v1267 = vpack.c.b16 %v1246, %v1245
        %v1268 = vpack.c.b16 %v1248, %v1247
        %v1269 = vpack.c.b16 %v1250, %v1249
        %v1270 = vpack.c.b16 %v1252, %v1251
        %v1271 = vpack.c.b16 %v1254, %v1253
        %v1272 = vpack.c.b16 %v1256, %v1255
        %1289 = vmatprep.subr.bf16.mxu0 0
        %1290 = vmatpush1.bf16.msra.mxu0 %v1257
        %1291 = vmatprep.subr.bf16.mxu0 0
        %1292 = vmatpush1.bf16.msra.mxu0 %v1258
        %1293 = vmatprep.subr.bf16.mxu0 0
        %1294 = vmatpush1.bf16.msra.mxu0 %v1259
        %1295 = vmatprep.subr.bf16.mxu0 0
        %1296 = vmatpush1.bf16.msra.mxu0 %v1260
        %1297 = vmatprep.subr.bf16.mxu0 0
        %1298 = vmatpush1.bf16.msra.mxu0 %v1261
        %1299 = vmatprep.subr.bf16.mxu0 0
        %1300 = vmatpush1.bf16.msra.mxu0 %v1262
        %1301 = vmatprep.subr.bf16.mxu0 0
        %1302 = vmatpush1.bf16.msra.mxu0 %v1263
        %1303 = vmatprep.subr.bf16.mxu0 0
        %1304 = vmatpush1.bf16.msra.mxu0 %v1264
        %1305 = vmatprep.subr.bf16.mxu0 0
        %1306 = vmatpush1.bf16.msra.mxu0 %v1265
        %1307 = vmatprep.subr.bf16.mxu0 0
        %1308 = vmatpush1.bf16.msra.mxu0 %v1266
        %1309 = vmatprep.subr.bf16.mxu0 0
        %1310 = vmatpush1.bf16.msra.mxu0 %v1267
        %1311 = vmatprep.subr.bf16.mxu0 0
        %1312 = vmatpush1.bf16.msra.mxu0 %v1268
        %1313 = vmatprep.subr.bf16.mxu0 0
        %1314 = vmatpush1.bf16.msra.mxu0 %v1269
        %1315 = vmatprep.subr.bf16.mxu0 0
        %1316 = vmatpush1.bf16.msra.mxu0 %v1270
        %1317 = vmatprep.subr.bf16.mxu0 0
        %1318 = vmatpush1.bf16.msra.mxu0 %v1271
        %1319 = vmatprep.subr.bf16.mxu0 0
        %1320 = vmatpush1.bf16.msra.mxu0 %v1272
        %1321 = vmatprep.mubr.bf16.mxu0 %v1155
        %1322 = vmatmul.mubr.bf16.gmra.mrb[0].mxu0 %v1154
        %v1323 = vpop.f32.mrb[0].mxu0
        %v1324 = vadd.f32 %v1192, %v1323
        %v1325 = vpop.f32.mrb[0].mxu0
        %v1326 = vpop.f32.mrb[0].mxu0
        %v1327 = vpop.f32.mrb[0].mxu0
        %1328 = vdwg.mxu0
        %1329 = vst [vmem:[%s316] sm:$0xff] %v1324
        %s1330 = sand.u32 %s154, 1
        %s1331 = scalar_lea.sflag [#allocation8], %s1330
        %s1332 = sand.u32 %s154, 1
        %s1333 = smul.addr %s1332, 8
        %s1334 = scalar_lea.vmem [#allocation14], %s1333
        // Predicated region
        $region57: #{tpu_custom_call.1} parent=39 // pred_check
          %p1335 = pneg %p164
        $region58: #{tpu_custom_call.1} parent=39 // pred_check_branch
          %1337 = sbr.rel (%p1335) target = $region60
        $region59: #{tpu_custom_call.1} parent=39 // pred_region
          %s1339 = ssub.s32 128, 128
          %1340 = vsyncadd %s1331, %s1339
          %s1341 = smul.addr %s31, 128
          %s1342 = scalar_lea.hbm %s6, %s1341
          %s1344 = sshll.u32 %s1334, 4
          %s1345 = int_to_ptr.vmem [resolvable:$true] %s1344
          %1347 = dma.vmem_to_hbm [thread:$0]  %s1345, 128, %s1342, %s1331
        $region60: #{tpu_custom_call.1} parent=39 // pred_fallthru
          _
      $region40: #{tpu_custom_call.1} parent=5 // pred_fallthru
        _
      %p1348 = scmp.le.s32.totalorder 2, %s26
      // Predicated region
      $region61: #{tpu_custom_call.1} parent=5 // pred_check
        %p1349 = pneg %p1348
      $region62: #{tpu_custom_call.1} parent=5 // pred_check_branch
        %1351 = sbr.rel (%p1349) target = $region64
      $region63: #{tpu_custom_call.1} parent=5 // pred_region
        %s1352 = ssub.s32 %s26, 2
        // Predicated region
        $region65: #{tpu_custom_call.1} parent=63 // pred_check
          %p1353 = pneg %p170
        $region66: #{tpu_custom_call.1} parent=63 // pred_check_branch
          %1355 = sbr.rel (%p1353) target = $region68
        $region67: #{tpu_custom_call.1} parent=63 // pred_region
          %s1356 = sand.u32 %s155, 1
          %s1357 = scalar_lea.sflag [#allocation8], %s1356
          %s1358 = sand.u32 %s155, 1
          %s1359 = smul.addr %s1358, 8
          %s1360 = scalar_lea.vmem [#allocation14], %s1359
          %1361 = dma.done %s1357, 128
        $region68: #{tpu_custom_call.1} parent=63 // pred_fallthru
          _
      $region64: #{tpu_custom_call.1} parent=5 // pred_fallthru
        _
    $region6: #{tpu_custom_call.1} parent=1 // loop_footer
      %s30 = sadd.s32 1, %s26
    $region7: #{tpu_custom_call.1} parent=1 // loop_footer_branch
      %25 = sbr.rel target = $region3
    $region8: #{tpu_custom_call.1} parent=1 // loop_exit
      _
    %1362 = vsyncpa [#allocation7], 1
    %s1363 = scalar_lea.sflag [#allocation7], 1
    %1364 = vsyncpa %s1363, 1
    %1365 = vsyncpa [#allocation10], 1
    %s1366 = scalar_lea.sflag [#allocation10], 1
    %1367 = vsyncpa %s1366, 1
    %1368 = vsyncpa [#allocation13], 1
    %1369 = vsyncpa [#allocation8], 1
    %s1370 = scalar_lea.sflag [#allocation8], 1
    %1371 = vsyncpa %s1370, 1

</llo_original>
